<compile_context>
chip_gen: v6e
topology: v6e:2x2x1
jax: 0.10.0
libtpu: 0.0.40
codegen_flags: <defaults>
</compile_context>

<pallas_src>
import math
import functools

import jax
import jax.numpy as jnp
from jax.experimental import pallas as pl
from jax.experimental.pallas import tpu as pltpu

# Matmul operand / weight-storage dtype.  bf16 halves the per-block HBM weight
# traffic and runs at native MXU rate on v6e/v7x; accumulation stays f32 via
# preferred_element_type and all VPU math (LayerNorm/softmax/bias) stays f32.
# Set to jnp.float32 for exact parity with the f32 reference math.
_MM_DTYPE = jnp.bfloat16


def _round_up(x, m):
    return (x + m - 1) // m * m


def _positional_encoding(max_len, num_hiddens):
    pos = jnp.arange(max_len, dtype=jnp.float32)[:, None]
    inv = jnp.power(10000.0,
                    jnp.arange(0, num_hiddens, 2, dtype=jnp.float32) / num_hiddens)
    ang = pos / inv                                            # (max_len, H/2)
    P = jnp.stack([jnp.sin(ang), jnp.cos(ang)], axis=-1)       # (max_len, H/2, 2)
    return P.reshape(max_len, num_hiddens)                     # sin at 0::2, cos at 1::2


def _group_bias(n_q, n_k, q_group, k_group):
    """Additive mask (0 / -1e30): query row r attends key row c iff both belong
    to the same MHA batch element (= same decoding step in the reference's
    seq-first reading).  Every query row has >=1 valid key, so softmax is safe."""
    qg = jnp.arange(n_q, dtype=jnp.int32) // q_group
    kg = jnp.arange(n_k, dtype=jnp.int32) // k_group
    return jnp.where(qg[:, None] == kg[None, :], 0.0, -1e30).astype(jnp.float32)


# ------------------------------ fused kernel ---------------------------------

def _fused_decoder_kernel(
        x0_ref, enc_ref, self_bias_ref, enc_bias_ref,
        qkv_w_ref, wo_ref, ffn_w1_ref, ffn_w2_ref, small_ref,
        fc_w_ref, fc_b_ref,
        kv_out_ref, logits_ref,
        x_sc,
        *, num_heads, h_real, dh_real):
    b = pl.program_id(0)
    last = pl.num_programs(0) - 1
    mm = _MM_DTYPE

    nh, H, dh = num_heads, h_real, dh_real
    Hp = x_sc.shape[-1]          # padded hidden width
    Dp = wo_ref.shape[2]         # packed-heads width (nh*dh padded to 128)
    Fp = ffn_w1_ref.shape[-1]    # padded FFN width

    # Block 0 consumes the embedded+positional input; later blocks consume the
    # previous block's output, which stays resident in VMEM scratch.
    @pl.when(b == 0)
    def _():
        x_sc[...] = x0_ref[...]

    x = x_sc[...]                       # (R, Hp) block input
    kv_out_ref[0, :, :] = x             # state[2][b] = key_values (= block input)
    R = x.shape[0]

    # Per-head lane masks over the packed-heads layout (built once, reused by
    # both attentions; iota + compare is VPU filler).
    lane = jax.lax.broadcasted_iota(jnp.int32, (1, Dp), 1)
    head_mask = [((lane >= h * dh) & (lane < (h + 1) * dh)).astype(jnp.float32)
                 for h in range(nh)]

    # Coalesced small-parameter slab row map (all widths are multiples of 128):
    #   0..2 : q/k/v bias attn0     3..5 : q/k/v bias attn1      (width Dp)
    #   6,7  : out-proj bias attn0/attn1                          (width Hp)
    #   8..13: LN gamma0,beta0,gamma1,beta1,gamma2,beta2           (width Hp)
    #   14   : ffn b1 (width Fp)    15: ffn b2 (width Hp)
    def srow(r, width):
        return small_ref[0, r:r + 1, 0:width]                   # (1, width)

    def layer_norm(v, idx):
        # PyTorch LayerNorm over the REAL hidden lanes (eps=1e-5).  Padded lanes
        # are exactly zero, so sum-based statistics divided by H reproduce the
        # unpadded mean/var exactly.  (E[x^2]-mean^2 form; fine at this scale.)
        gamma = srow(8 + 2 * idx, Hp)
        beta = srow(9 + 2 * idx, Hp)
        inv_h = 1.0 / H
        mean = jnp.sum(v, axis=-1, keepdims=True) * inv_h
        var = jnp.sum(v * v, axis=-1, keepdims=True) * inv_h - mean * mean
        return (v - mean) * jax.lax.rsqrt(var + 1e-5) * gamma + beta

    def mha(q_in, kv_in, a, bias, self_attn):
        w = qkv_w_ref[0, a]                                      # (Hp, 3*Dp) bf16
        wo = wo_ref[0, a]                                        # (Dp, Hp)  bf16
        bq = srow(3 * a + 0, Dp)
        bk = srow(3 * a + 1, Dp)
        bv = srow(3 * a + 2, Dp)
        bo = srow(6 + a, Hp)

        if self_attn:
            # key_values == query source: one wide lane-dense projection.
            qkv = jnp.dot(q_in.astype(mm), w, preferred_element_type=jnp.float32)
            q = qkv[:, 0:Dp] + bq
            k = qkv[:, Dp:2 * Dp] + bk
            v = qkv[:, 2 * Dp:3 * Dp] + bv
        else:
            q = jnp.dot(q_in.astype(mm), w[:, 0:Dp],
                        preferred_element_type=jnp.float32) + bq
            kv = jnp.dot(kv_in.astype(mm), w[:, Dp:3 * Dp],
                         preferred_element_type=jnp.float32)
            k = kv[:, 0:Dp] + bk
            v = kv[:, Dp:2 * Dp] + bv

        # Per-head attention in the packed layout: masking q restricts the
        # full-width (K = Dp) contraction to head h's lanes; 1/sqrt(dh) is
        # already folded into W_q host-side.
        o_packed = jnp.zeros((R, Dp), jnp.float32)
        for h in range(nh):
            m = head_mask[h]
            s = jax.lax.dot_general((q * m).astype(mm), k.astype(mm),
                                    (((1,), (1,)), ((), ())),
                                    preferred_element_type=jnp.float32)
            s = s + bias
            s = s - jnp.max(s, axis=-1, keepdims=True)
            p = jnp.exp(s)
            p = p * pl.reciprocal(jnp.sum(p, axis=-1, keepdims=True), approx=True)
            pv = jnp.dot(p.astype(mm), v.astype(mm),
                         preferred_element_type=jnp.float32)
            o_packed = o_packed + pv * m
        # Concat-heads output projection as a single lane-dense dot (K = Dp);
        # o_packed already IS the heads-concatenated layout (no concat op).
        return jnp.dot(o_packed.astype(mm), wo,
                       preferred_element_type=jnp.float32) + bo

    # 1) decoder self-attention + AddNorm (key_values == block input here).
    y = layer_norm(x + mha(x, x, 0, self_bias_ref[...], True), 0)
    # 2) encoder-decoder attention + AddNorm.
    z = layer_norm(y + mha(y, enc_ref[...], 1, enc_bias_ref[...], False), 1)
    # 3) position-wise FFN + AddNorm.
    hid = jnp.maximum(
        jnp.dot(z.astype(mm), ffn_w1_ref[0],
                preferred_element_type=jnp.float32) + srow(14, Fp), 0.0)
    f = jnp.dot(hid.astype(mm), ffn_w2_ref[0],
                preferred_element_type=jnp.float32) + srow(15, Hp)
    out = layer_norm(z + f, 2)
    x_sc[...] = out

    # Final vocab projection folded into the last grid step (lane-dense Vp).
    @pl.when(b == last)
    def _():
        logits_ref[...] = (jnp.dot(out.astype(mm), fc_w_ref[...],
                                   preferred_element_type=jnp.float32)
                           + fc_b_ref[...])


# ------------------------------ model wrapper ---------------------------------

class PallasTransformerDecoder:
    def __init__(self, vocab_size, num_hiddens, ffn_num_hiddens, num_heads,
                 num_blks, dropout, key, max_len=1000):
        del dropout  # eval-mode: dropout is identity
        assert num_hiddens % num_heads == 0
        self.vocab_size = vocab_size
        self.H = num_hiddens
        self.F = ffn_num_hiddens
        self.num_heads = num_heads
        self.num_blks = num_blks
        self.Dh = num_hiddens // num_heads

        # lane-padded sizes: every matmul minor dim is a multiple of 128.
        self.Hp = _round_up(self.H, 128)
        self.Dp = _round_up(self.num_heads * self.Dh, 128)   # packed-heads width
        self.Fp = _round_up(self.F, 128)
        self.Vp = _round_up(vocab_size, 128)

        H, F, Dh, nh, nb, V = self.H, self.F, self.Dh, num_heads, num_blks, vocab_size
        Hp, Dp, Fp, Vp = self.Hp, self.Dp, self.Fp, self.Vp
        Pmax = max(Dp, Hp, Fp)
        s = 0.1
        ks = jax.random.split(key, 7)

        def rnd(k, shape):
            return jax.random.normal(k, shape, jnp.float32) * s

        # Embedding / positional tables stay f32 (gathered host-side once).
        self.embedding = jnp.zeros((V, Hp), jnp.float32
                                   ).at[:, :H].set(rnd(ks[0], (V, H)))
        self.P = jnp.zeros((max_len, Hp), jnp.float32
                           ).at[:, :H].set(_positional_encoding(max_len, H))

        # Attention weights: heads packed BEFORE the single lane pad.  Q/K/V each
        # occupy their own 128-aligned lane block of width Dp so every in-kernel
        # slice is lane-block aligned; the q columns are pre-scaled by 1/sqrt(Dh).
        wq = rnd(ks[1], (nb, 2, H, H)) * (1.0 / math.sqrt(Dh))
        wkv = rnd(ks[2], (nb, 2, 2, H, H))
        qkv = jnp.zeros((nb, 2, Hp, 3 * Dp), jnp.float32)
        qkv = qkv.at[:, :, :H, 0:H].set(wq)
        qkv = qkv.at[:, :, :H, Dp:Dp + H].set(wkv[:, :, 0])
        qkv = qkv.at[:, :, :H, 2 * Dp:2 * Dp + H].set(wkv[:, :, 1])
        self.qkv_w = qkv.astype(_MM_DTYPE)

        # Concat-heads output projection: (Dp, Hp) with real rows [0:H).
        self.wo = (jnp.zeros((nb, 2, Dp, Hp), jnp.float32)
                   .at[:, :, :H, :H].set(rnd(ks[3], (nb, 2, H, H)))).astype(_MM_DTYPE)

        self.ffn_w1 = (jnp.zeros((nb, Hp, Fp), jnp.float32)
                       .at[:, :H, :F].set(rnd(ks[4], (nb, H, F)))).astype(_MM_DTYPE)
        self.ffn_w2 = (jnp.zeros((nb, Fp, Hp), jnp.float32)
                       .at[:, :F, :H].set(rnd(ks[5], (nb, F, H)))).astype(_MM_DTYPE)

        self.fc_w = (jnp.zeros((Hp, Vp), jnp.float32)
                     .at[:H, :V].set(rnd(ks[6], (H, V)))).astype(_MM_DTYPE)
        self.fc_b = jnp.zeros((1, Vp), jnp.float32)

        # Coalesced small-parameter slab: all biases + LayerNorm params for one
        # block in a single (16, Pmax) f32 tile -> one DMA per grid step.
        # (All biases are zero, matching nn.MultiheadAttention's zero bias init;
        #  LN gammas=1 on real lanes.)
        small = jnp.zeros((nb, 16, Pmax), jnp.float32)
        small = small.at[:, 8:14:2, :H].set(1.0)      # LN gammas (rows 8,10,12)
        self.small = small

        # jit the whole host wrapper once (embedding gather, pads, transposes,
        # pallas_call, post-slices) so the surrounding XLA ops fuse.
        self._fwd = jax.jit(self._forward_impl)

    def init_state(self, enc_outputs, enc_valid_lens):
        # TODO(synk): enc_valid_lens is carried (as in the reference) but the
        # reference never passes it to nn.MultiheadAttention, so it is unused.
        return [enc_outputs, enc_valid_lens, [None] * self.num_blks]

    def _run_fused(self, x0, enc, self_bias, enc_bias):
        R = x0.shape[0]
        Rk = enc.shape[0]
        nb, Hp, Vp = self.num_blks, self.Hp, self.Vp

        def full2(b): return (0, 0)
        def blk3(b): return (b, 0, 0)
        def blk4(b): return (b, 0, 0, 0)

        in_specs = [
            pl.BlockSpec((R, Hp), full2),
            pl.BlockSpec((Rk, Hp), full2),
            pl.BlockSpec(self_bias.shape, full2),
            pl.BlockSpec(enc_bias.shape, full2),
            pl.BlockSpec((1,) + self.qkv_w.shape[1:], blk4),
            pl.BlockSpec((1,) + self.wo.shape[1:], blk4),
            pl.BlockSpec((1,) + self.ffn_w1.shape[1:], blk3),
            pl.BlockSpec((1,) + self.ffn_w2.shape[1:], blk3),
            pl.BlockSpec((1,) + self.small.shape[1:], blk3),
            pl.BlockSpec(self.fc_w.shape, full2),
            pl.BlockSpec(self.fc_b.shape, full2),
        ]
        out_shape = (
            jax.ShapeDtypeStruct((nb, R, Hp), jnp.float32),   # per-block key_values
            jax.ShapeDtypeStruct((R, Vp), jnp.float32),        # lane-dense logits
        )
        out_specs = [
            pl.BlockSpec((1, R, Hp), blk3),
            pl.BlockSpec((R, Vp), full2),
        ]
        kernel = functools.partial(
            _fused_decoder_kernel,
            num_heads=self.num_heads, h_real=self.H, dh_real=self.Dh)

        # TODO(synk): at larger model dims, set vmem_limit_bytes here and/or use
        # pipeline_mode=pl.Buffered(3) on the weight slabs (v7x has 64 MiB VMEM),
        # and add a parallel row-tile grid axis so both v7x TensorCores are used.
        return pl.pallas_call(
            kernel,
            out_shape=out_shape,
            grid_spec=pltpu.PrefetchScalarGridSpec(
                num_scalar_prefetch=0,
                grid=(nb,),
                in_specs=in_specs,
                out_specs=out_specs,
                scratch_shapes=[pltpu.VMEM((R, Hp), jnp.float32)]),
            compiler_params=pltpu.CompilerParams(
                dimension_semantics=("arbitrary",)),   # block axis is a serial chain
        )(x0, enc, self_bias, enc_bias,
          self.qkv_w, self.wo, self.ffn_w1, self.ffn_w2, self.small,
          self.fc_w, self.fc_b)

    def _forward_impl(self, X, enc_outputs):
        B, T = X.shape
        Be, Te, He = enc_outputs.shape
        H, Hp, Vp, V, nb = self.H, self.Hp, self.Vp, self.vocab_size, self.num_blks

        # One layout conversion for the whole forward: rows are (step-major,
        # batch-minor) -- matching nn.MultiheadAttention's seq-first reading of
        # the (batch, steps, hidden) tensors -- lanes are the 128-padded hidden.
        # TODO(synk): the embedding gather could be fused into the first grid
        # step via scalar-prefetched token ids (num_scalar_prefetch=1).
        emb = jnp.take(self.embedding, X.T, axis=0) * math.sqrt(H)    # (T, B, Hp)
        x0 = (emb + self.P[:T, None, :]).reshape(T * B, Hp)

        enc = jnp.transpose(enc_outputs, (1, 0, 2))                    # (Te, Be, He)
        enc = jnp.pad(enc, ((0, 0), (0, 0), (0, Hp - He))).reshape(Te * Be, Hp)

        self_bias = _group_bias(T * B, T * B, B, B)
        enc_bias = _group_bias(T * B, Te * Be, B, Be)

        kv_stack, logits_p = self._run_fused(x0, enc, self_bias, enc_bias)

        kv = kv_stack.reshape(nb, T, B, Hp)[:, :, :, :H]
        kv = jnp.transpose(kv, (0, 2, 1, 3))                           # (nb, B, T, H)
        logits = jnp.transpose(
            logits_p.reshape(T, B, Vp), (1, 0, 2))[:, :, :V]           # (B, T, V)
        return logits, kv

    def forward(self, X, state):
        # TODO(synk): incremental decoding with cached state[2][i] (growing
        # key_values) is not supported by the fused kernel; this implements the
        # fresh-state forward pass, which is how the reference module is run.
        logits, kv = self._fwd(X, state[0])
        for i in range(self.num_blks):
            state[2][i] = kv[i]
        return logits, state


# ----------------------------------- main -------------------------------------

if __name__ == "__main__":
    vocab_size, num_hiddens, ffn_num_hiddens = 50, 32, 64
    num_heads, num_blks = 2, 2
    B, T = 2, 8

    root = jax.random.PRNGKey(0)
    k_model, k_tok, k_enc = jax.random.split(root, 3)

    model = PallasTransformerDecoder(vocab_size, num_hiddens, ffn_num_hiddens,
                                     num_heads, num_blks, dropout=0.0, key=k_model)

    X = jax.random.randint(k_tok, (B, T), 0, vocab_size, dtype=jnp.int32)
    enc_outputs = jax.random.normal(k_enc, (B, T, num_hiddens), jnp.float32)
    enc_valid_lens = jnp.full((B,), T, dtype=jnp.int32)  # carried in state, unused
    state = model.init_state(enc_outputs, enc_valid_lens)

    logits, state = model.forward(X, state)
    jax.block_until_ready(logits)

    assert logits.shape == (B, T, vocab_size)
    assert logits.dtype == jnp.float32
    assert state[2][0].shape == (B, T, num_hiddens)
    assert bool(jnp.all(jnp.isfinite(logits)))
    print("KERNEL_OK")
</pallas_src>

<mosaic_0001>
module attributes {stable_mosaic.version = 11 : i64} {
  func.func @_fused_decoder_kernel(%arg0: i32, %arg1: memref<16x128xf32, #tpu.memory_space<vmem>>, %arg2: memref<16x128xf32, #tpu.memory_space<vmem>>, %arg3: memref<16x16xf32, #tpu.memory_space<vmem>>, %arg4: memref<16x16xf32, #tpu.memory_space<vmem>>, %arg5: memref<1x2x128x384xbf16, #tpu.memory_space<vmem>>, %arg6: memref<1x2x128x128xbf16, #tpu.memory_space<vmem>>, %arg7: memref<1x128x128xbf16, #tpu.memory_space<vmem>>, %arg8: memref<1x128x128xbf16, #tpu.memory_space<vmem>>, %arg9: memref<1x16x128xf32, #tpu.memory_space<vmem>>, %arg10: memref<128x128xbf16, #tpu.memory_space<vmem>>, %arg11: memref<1x128xf32, #tpu.memory_space<vmem>>, %arg12: memref<1x16x128xf32, #tpu.memory_space<vmem>>, %arg13: memref<16x128xf32, #tpu.memory_space<vmem>>, %arg14: memref<16x128xf32, #tpu.memory_space<vmem>>) attributes {dimension_semantics = [#tpu.dimension_semantics<arbitrary>], iteration_bounds = array<i64: 2>, scalar_prefetch = 0 : i64, scratch_operands = 1 : i64, tpu.core_type = #tpu.core_type<tc>, window_params = [{pipeline_mode = #tpu.pipeline_mode<synchronous>, transform_indices = @transform_0, window_bounds = array<i64: 16, 128>}, {pipeline_mode = #tpu.pipeline_mode<synchronous>, transform_indices = @transform_1, window_bounds = array<i64: 16, 128>}, {pipeline_mode = #tpu.pipeline_mode<synchronous>, transform_indices = @transform_2, window_bounds = array<i64: 16, 16>}, {pipeline_mode = #tpu.pipeline_mode<synchronous>, transform_indices = @transform_3, window_bounds = array<i64: 16, 16>}, {transform_indices = @transform_4, window_bounds = array<i64: 1, 2, 128, 384>}, {transform_indices = @transform_5, window_bounds = array<i64: 1, 2, 128, 128>}, {transform_indices = @transform_6, window_bounds = array<i64: 1, 128, 128>}, {transform_indices = @transform_7, window_bounds = array<i64: 1, 128, 128>}, {transform_indices = @transform_8, window_bounds = array<i64: 1, 16, 128>}, {pipeline_mode = #tpu.pipeline_mode<synchronous>, transform_indices = @transform_9, window_bounds = array<i64: 128, 128>}, {pipeline_mode = #tpu.pipeline_mode<synchronous>, transform_indices = @transform_10, window_bounds = array<i64: 1, 128>}, {transform_indices = @transform_11, window_bounds = array<i64: 1, 16, 128>}, {pipeline_mode = #tpu.pipeline_mode<synchronous>, transform_indices = @transform_12, window_bounds = array<i64: 16, 128>}]} {
    %c0_i32 = arith.constant 0 : i32
    %0 = arith.cmpi eq, %arg0, %c0_i32 : i32
    %1 = arith.extui %0 : i1 to i32
    %c0_i32_0 = arith.constant 0 : i32
    %2 = arith.cmpi ne, %1, %c0_i32_0 : i32
    scf.if %2 {
      %c0_111 = arith.constant 0 : index
      %c0_112 = arith.constant 0 : index
      %275 = vector.load %arg1[%c0_111, %c0_112] : memref<16x128xf32, #tpu.memory_space<vmem>>, vector<16x128xf32>
      %c0_113 = arith.constant 0 : index
      %c0_114 = arith.constant 0 : index
      %276 = vector.load %arg14[%c0_113, %c0_114] : memref<16x128xf32, #tpu.memory_space<vmem>>, vector<16x128xf32>
      tpu.vector_store %arg14[%c0_113, %c0_114], %275 {strides = array<i32>} : memref<16x128xf32, #tpu.memory_space<vmem>>, vector<16x128xf32>,
    } else {
    }
    %c0 = arith.constant 0 : index
    %c0_1 = arith.constant 0 : index
    %3 = vector.load %arg14[%c0, %c0_1] : memref<16x128xf32, #tpu.memory_space<vmem>>, vector<16x128xf32>
    %c0_2 = arith.constant 0 : index
    %c0_3 = arith.constant 0 : index
    %c0_4 = arith.constant 0 : index
    %4 = vector.load %arg12[%c0_2, %c0_3, %c0_4] : memref<1x16x128xf32, #tpu.memory_space<vmem>>, vector<1x16x128xf32>
    %5 = vector.shape_cast %4 : vector<1x16x128xf32> to vector<16x128xf32>
    %6 = vector.shape_cast %3 : vector<16x128xf32> to vector<1x16x128xf32>
    tpu.vector_store %arg12[%c0_2, %c0_3, %c0_4], %6 {strides = array<i32>} : memref<1x16x128xf32, #tpu.memory_space<vmem>>, vector<1x16x128xf32>,
    %7 = tpu.iota {dimensions = array<i32: 1>} : vector<1x128xi32>
    %c0_i32_5 = arith.constant 0 : i32
    %8 = vector.broadcast %c0_i32_5 : i32 to vector<1x128xi32>
    %9 = arith.cmpi sge, %7, %8 : vector<1x128xi32>
    %c16_i32 = arith.constant 16 : i32
    %10 = vector.broadcast %c16_i32 : i32 to vector<1x128xi32>
    %11 = arith.cmpi slt, %7, %10 : vector<1x128xi32>
    %12 = arith.andi %9, %11 : vector<1x128xi1>
    %13 = arith.extui %12 : vector<1x128xi1> to vector<1x128xi32>
    %14 = arith.sitofp %13 : vector<1x128xi32> to vector<1x128xf32>
    %c16_i32_6 = arith.constant 16 : i32
    %15 = vector.broadcast %c16_i32_6 : i32 to vector<1x128xi32>
    %16 = arith.cmpi sge, %7, %15 : vector<1x128xi32>
    %c32_i32 = arith.constant 32 : i32
    %17 = vector.broadcast %c32_i32 : i32 to vector<1x128xi32>
    %18 = arith.cmpi slt, %7, %17 : vector<1x128xi32>
    %19 = arith.andi %16, %18 : vector<1x128xi1>
    %20 = arith.extui %19 : vector<1x128xi1> to vector<1x128xi32>
    %21 = arith.sitofp %20 : vector<1x128xi32> to vector<1x128xf32>
    %c0_7 = arith.constant 0 : index
    %c0_8 = arith.constant 0 : index
    %22 = vector.load %arg3[%c0_7, %c0_8] : memref<16x16xf32, #tpu.memory_space<vmem>>, vector<16x16xf32>
    %c0_9 = arith.constant 0 : index
    %c0_10 = arith.constant 0 : index
    %c0_11 = arith.constant 0 : index
    %c0_12 = arith.constant 0 : index
    %23 = vector.load %arg5[%c0_9, %c0_10, %c0_11, %c0_12] : memref<1x2x128x384xbf16, #tpu.memory_space<vmem>>, vector<1x1x128x384xbf16>
    %24 = vector.shape_cast %23 : vector<1x1x128x384xbf16> to vector<128x384xbf16>
    %c0_13 = arith.constant 0 : index
    %c0_14 = arith.constant 0 : index
    %c0_15 = arith.constant 0 : index
    %c0_16 = arith.constant 0 : index
    %25 = vector.load %arg6[%c0_13, %c0_14, %c0_15, %c0_16] : memref<1x2x128x128xbf16, #tpu.memory_space<vmem>>, vector<1x1x128x128xbf16>
    %26 = vector.shape_cast %25 : vector<1x1x128x128xbf16> to vector<128x128xbf16>
    %c0_17 = arith.constant 0 : index
    %c0_18 = arith.constant 0 : index
    %c0_19 = arith.constant 0 : index
    %27 = vector.load %arg9[%c0_17, %c0_18, %c0_19] : memref<1x16x128xf32, #tpu.memory_space<vmem>>, vector<1x1x128xf32>
    %28 = vector.shape_cast %27 : vector<1x1x128xf32> to vector<1x128xf32>
    %c0_20 = arith.constant 0 : index
    %c1 = arith.constant 1 : index
    %c0_21 = arith.constant 0 : index
    %29 = vector.load %arg9[%c0_20, %c1, %c0_21] : memref<1x16x128xf32, #tpu.memory_space<vmem>>, vector<1x1x128xf32>
    %30 = vector.shape_cast %29 : vector<1x1x128xf32> to vector<1x128xf32>
    %c0_22 = arith.constant 0 : index
    %c2 = arith.constant 2 : index
    %c0_23 = arith.constant 0 : index
    %31 = vector.load %arg9[%c0_22, %c2, %c0_23] : memref<1x16x128xf32, #tpu.memory_space<vmem>>, vector<1x1x128xf32>
    %32 = vector.shape_cast %31 : vector<1x1x128xf32> to vector<1x128xf32>
    %c0_24 = arith.constant 0 : index
    %c6 = arith.constant 6 : index
    %c0_25 = arith.constant 0 : index
    %33 = vector.load %arg9[%c0_24, %c6, %c0_25] : memref<1x16x128xf32, #tpu.memory_space<vmem>>, vector<1x1x128xf32>
    %34 = vector.shape_cast %33 : vector<1x1x128xf32> to vector<1x128xf32>
    %35 = arith.truncf %3 : vector<16x128xf32> to vector<16x128xbf16>
    %cst = arith.constant dense<0.000000e+00> : vector<16x384xf32>
    %36 = tpu.matmul %35, %24, %cst {dimension_numbers = #tpu.dot_dimension_numbers<[1], [0], [0], [1], [0, 0, 1, 1], [], []>} : vector<16x128xbf16>, vector<128x384xbf16>, vector<16x384xf32> -> vector<16x384xf32>
    %37 = vector.extract_strided_slice %36 {offsets = [0, 0], sizes = [16, 128], strides = [1, 1]} : vector<16x384xf32> to vector<16x128xf32>
    %38 = vector.broadcast %28 : vector<1x128xf32> to vector<16x128xf32>
    %39 = arith.addf %37, %38 : vector<16x128xf32>
    %40 = vector.extract_strided_slice %36 {offsets = [0, 128], sizes = [16, 128], strides = [1, 1]} : vector<16x384xf32> to vector<16x128xf32>
    %41 = vector.broadcast %30 : vector<1x128xf32> to vector<16x128xf32>
    %42 = arith.addf %40, %41 : vector<16x128xf32>
    %43 = vector.extract_strided_slice %36 {offsets = [0, 256], sizes = [16, 128], strides = [1, 1]} : vector<16x384xf32> to vector<16x128xf32>
    %44 = vector.broadcast %32 : vector<1x128xf32> to vector<16x128xf32>
    %45 = arith.addf %43, %44 : vector<16x128xf32>
    %cst_26 = arith.constant 0.000000e+00 : f32
    %46 = vector.broadcast %cst_26 : f32 to vector<16x128xf32>
    %47 = vector.broadcast %14 : vector<1x128xf32> to vector<16x128xf32>
    %48 = arith.mulf %39, %47 : vector<16x128xf32>
    %49 = arith.truncf %48 : vector<16x128xf32> to vector<16x128xbf16>
    %50 = arith.truncf %42 : vector<16x128xf32> to vector<16x128xbf16>
    %cst_27 = arith.constant dense<0.000000e+00> : vector<16x16xf32>
    %51 = tpu.matmul %49, %50, %cst_27 {dimension_numbers = #tpu.dot_dimension_numbers<[1], [1], [0], [0], [0, 0, 1, 0], [], []>} : vector<16x128xbf16>, vector<16x128xbf16>, vector<16x16xf32> -> vector<16x16xf32>
    %52 = arith.addf %51, %22 : vector<16x16xf32>
    %cst_28 = arith.constant dense<0xFF800000> : vector<16xf32>
    %53 = vector.multi_reduction <maximumf>, %52, %cst_28 [1] : vector<16x16xf32> to vector<16xf32>
    %54 = vector.shape_cast %53 : vector<16xf32> to vector<16x1xf32>
    %55 = vector.broadcast %54 : vector<16x1xf32> to vector<16x16xf32>
    %56 = arith.subf %52, %55 : vector<16x16xf32>
    %57 = math.exp %56 : vector<16x16xf32>
    %cst_29 = arith.constant dense<0.000000e+00> : vector<16xf32>
    %58 = vector.multi_reduction <add>, %57, %cst_29 [1] : vector<16x16xf32> to vector<16xf32>
    %59 = vector.shape_cast %58 : vector<16xf32> to vector<16x1xf32>
    %60 = tpu.reciprocal %59 {approx = true} : vector<16x1xf32> -> vector<16x1xf32>
    %61 = vector.broadcast %60 : vector<16x1xf32> to vector<16x16xf32>
    %62 = arith.mulf %57, %61 : vector<16x16xf32>
    %63 = arith.truncf %62 : vector<16x16xf32> to vector<16x16xbf16>
    %64 = arith.truncf %45 : vector<16x128xf32> to vector<16x128xbf16>
    %cst_30 = arith.constant dense<0.000000e+00> : vector<16x128xf32>
    %65 = tpu.matmul %63, %64, %cst_30 {dimension_numbers = #tpu.dot_dimension_numbers<[1], [0], [0], [1], [0, 0, 1, 1], [], []>} : vector<16x16xbf16>, vector<16x128xbf16>, vector<16x128xf32> -> vector<16x128xf32>
    %66 = vector.broadcast %14 : vector<1x128xf32> to vector<16x128xf32>
    %67 = arith.mulf %65, %66 : vector<16x128xf32>
    %68 = arith.addf %46, %67 : vector<16x128xf32>
    %69 = vector.broadcast %21 : vector<1x128xf32> to vector<16x128xf32>
    %70 = arith.mulf %39, %69 : vector<16x128xf32>
    %71 = arith.truncf %70 : vector<16x128xf32> to vector<16x128xbf16>
    %72 = arith.truncf %42 : vector<16x128xf32> to vector<16x128xbf16>
    %cst_31 = arith.constant dense<0.000000e+00> : vector<16x16xf32>
    %73 = tpu.matmul %71, %72, %cst_31 {dimension_numbers = #tpu.dot_dimension_numbers<[1], [1], [0], [0], [0, 0, 1, 0], [], []>} : vector<16x128xbf16>, vector<16x128xbf16>, vector<16x16xf32> -> vector<16x16xf32>
    %74 = arith.addf %73, %22 : vector<16x16xf32>
    %cst_32 = arith.constant dense<0xFF800000> : vector<16xf32>
    %75 = vector.multi_reduction <maximumf>, %74, %cst_32 [1] : vector<16x16xf32> to vector<16xf32>
    %76 = vector.shape_cast %75 : vector<16xf32> to vector<16x1xf32>
    %77 = vector.broadcast %76 : vector<16x1xf32> to vector<16x16xf32>
    %78 = arith.subf %74, %77 : vector<16x16xf32>
    %79 = math.exp %78 : vector<16x16xf32>
    %cst_33 = arith.constant dense<0.000000e+00> : vector<16xf32>
    %80 = vector.multi_reduction <add>, %79, %cst_33 [1] : vector<16x16xf32> to vector<16xf32>
    %81 = vector.shape_cast %80 : vector<16xf32> to vector<16x1xf32>
    %82 = tpu.reciprocal %81 {approx = true} : vector<16x1xf32> -> vector<16x1xf32>
    %83 = vector.broadcast %82 : vector<16x1xf32> to vector<16x16xf32>
    %84 = arith.mulf %79, %83 : vector<16x16xf32>
    %85 = arith.truncf %84 : vector<16x16xf32> to vector<16x16xbf16>
    %86 = arith.truncf %45 : vector<16x128xf32> to vector<16x128xbf16>
    %cst_34 = arith.constant dense<0.000000e+00> : vector<16x128xf32>
    %87 = tpu.matmul %85, %86, %cst_34 {dimension_numbers = #tpu.dot_dimension_numbers<[1], [0], [0], [1], [0, 0, 1, 1], [], []>} : vector<16x16xbf16>, vector<16x128xbf16>, vector<16x128xf32> -> vector<16x128xf32>
    %88 = vector.broadcast %21 : vector<1x128xf32> to vector<16x128xf32>
    %89 = arith.mulf %87, %88 : vector<16x128xf32>
    %90 = arith.addf %68, %89 : vector<16x128xf32>
    %91 = arith.truncf %90 : vector<16x128xf32> to vector<16x128xbf16>
    %cst_35 = arith.constant dense<0.000000e+00> : vector<16x128xf32>
    %92 = tpu.matmul %91, %26, %cst_35 {dimension_numbers = #tpu.dot_dimension_numbers<[1], [0], [0], [1], [0, 0, 1, 1], [], []>} : vector<16x128xbf16>, vector<128x128xbf16>, vector<16x128xf32> -> vector<16x128xf32>
    %93 = vector.broadcast %34 : vector<1x128xf32> to vector<16x128xf32>
    %94 = arith.addf %92, %93 : vector<16x128xf32>
    %95 = arith.addf %3, %94 : vector<16x128xf32>
    %c0_36 = arith.constant 0 : index
    %c8 = arith.constant 8 : index
    %c0_37 = arith.constant 0 : index
    %96 = vector.load %arg9[%c0_36, %c8, %c0_37] : memref<1x16x128xf32, #tpu.memory_space<vmem>>, vector<1x1x128xf32>
    %97 = vector.shape_cast %96 : vector<1x1x128xf32> to vector<1x128xf32>
    %c0_38 = arith.constant 0 : index
    %c9 = arith.constant 9 : index
    %c0_39 = arith.constant 0 : index
    %98 = vector.load %arg9[%c0_38, %c9, %c0_39] : memref<1x16x128xf32, #tpu.memory_space<vmem>>, vector<1x1x128xf32>
    %99 = vector.shape_cast %98 : vector<1x1x128xf32> to vector<1x128xf32>
    %cst_40 = arith.constant dense<0.000000e+00> : vector<16xf32>
    %100 = vector.multi_reduction <add>, %95, %cst_40 [1] : vector<16x128xf32> to vector<16xf32>
    %101 = vector.shape_cast %100 : vector<16xf32> to vector<16x1xf32>
    %cst_41 = arith.constant 3.125000e-02 : f32
    %102 = vector.broadcast %cst_41 : f32 to vector<16x1xf32>
    %103 = arith.mulf %101, %102 : vector<16x1xf32>
    %104 = arith.mulf %95, %95 : vector<16x128xf32>
    %cst_42 = arith.constant dense<0.000000e+00> : vector<16xf32>
    %105 = vector.multi_reduction <add>, %104, %cst_42 [1] : vector<16x128xf32> to vector<16xf32>
    %106 = vector.shape_cast %105 : vector<16xf32> to vector<16x1xf32>
    %cst_43 = arith.constant 3.125000e-02 : f32
    %107 = vector.broadcast %cst_43 : f32 to vector<16x1xf32>
    %108 = arith.mulf %106, %107 : vector<16x1xf32>
    %109 = arith.mulf %103, %103 : vector<16x1xf32>
    %110 = arith.subf %108, %109 : vector<16x1xf32>
    %111 = vector.broadcast %103 : vector<16x1xf32> to vector<16x128xf32>
    %112 = arith.subf %95, %111 : vector<16x128xf32>
    %cst_44 = arith.constant 9.99999974E-6 : f32
    %113 = vector.broadcast %cst_44 : f32 to vector<16x1xf32>
    %114 = arith.addf %110, %113 : vector<16x1xf32>
    %115 = math.rsqrt %114 : vector<16x1xf32>
    %116 = vector.broadcast %115 : vector<16x1xf32> to vector<16x128xf32>
    %117 = arith.mulf %112, %116 : vector<16x128xf32>
    %118 = vector.broadcast %97 : vector<1x128xf32> to vector<16x128xf32>
    %119 = arith.mulf %117, %118 : vector<16x128xf32>
    %120 = vector.broadcast %99 : vector<1x128xf32> to vector<16x128xf32>
    %121 = arith.addf %119, %120 : vector<16x128xf32>
    %c0_45 = arith.constant 0 : index
    %c0_46 = arith.constant 0 : index
    %122 = vector.load %arg2[%c0_45, %c0_46] : memref<16x128xf32, #tpu.memory_space<vmem>>, vector<16x128xf32>
    %c0_47 = arith.constant 0 : index
    %c0_48 = arith.constant 0 : index
    %123 = vector.load %arg4[%c0_47, %c0_48] : memref<16x16xf32, #tpu.memory_space<vmem>>, vector<16x16xf32>
    %c0_49 = arith.constant 0 : index
    %c1_50 = arith.constant 1 : index
    %c0_51 = arith.constant 0 : index
    %c0_52 = arith.constant 0 : index
    %124 = vector.load %arg5[%c0_49, %c1_50, %c0_51, %c0_52] : memref<1x2x128x384xbf16, #tpu.memory_space<vmem>>, vector<1x1x128x384xbf16>
    %125 = vector.shape_cast %124 : vector<1x1x128x384xbf16> to vector<128x384xbf16>
    %c0_53 = arith.constant 0 : index
    %c1_54 = arith.constant 1 : index
    %c0_55 = arith.constant 0 : index
    %c0_56 = arith.constant 0 : index
    %126 = vector.load %arg6[%c0_53, %c1_54, %c0_55, %c0_56] : memref<1x2x128x128xbf16, #tpu.memory_space<vmem>>, vector<1x1x128x128xbf16>
    %127 = vector.shape_cast %126 : vector<1x1x128x128xbf16> to vector<128x128xbf16>
    %c0_57 = arith.constant 0 : index
    %c3 = arith.constant 3 : index
    %c0_58 = arith.constant 0 : index
    %128 = vector.load %arg9[%c0_57, %c3, %c0_58] : memref<1x16x128xf32, #tpu.memory_space<vmem>>, vector<1x1x128xf32>
    %129 = vector.shape_cast %128 : vector<1x1x128xf32> to vector<1x128xf32>
    %c0_59 = arith.constant 0 : index
    %c4 = arith.constant 4 : index
    %c0_60 = arith.constant 0 : index
    %130 = vector.load %arg9[%c0_59, %c4, %c0_60] : memref<1x16x128xf32, #tpu.memory_space<vmem>>, vector<1x1x128xf32>
    %131 = vector.shape_cast %130 : vector<1x1x128xf32> to vector<1x128xf32>
    %c0_61 = arith.constant 0 : index
    %c5 = arith.constant 5 : index
    %c0_62 = arith.constant 0 : index
    %132 = vector.load %arg9[%c0_61, %c5, %c0_62] : memref<1x16x128xf32, #tpu.memory_space<vmem>>, vector<1x1x128xf32>
    %133 = vector.shape_cast %132 : vector<1x1x128xf32> to vector<1x128xf32>
    %c0_63 = arith.constant 0 : index
    %c7 = arith.constant 7 : index
    %c0_64 = arith.constant 0 : index
    %134 = vector.load %arg9[%c0_63, %c7, %c0_64] : memref<1x16x128xf32, #tpu.memory_space<vmem>>, vector<1x1x128xf32>
    %135 = vector.shape_cast %134 : vector<1x1x128xf32> to vector<1x128xf32>
    %136 = arith.truncf %121 : vector<16x128xf32> to vector<16x128xbf16>
    %137 = vector.extract_strided_slice %125 {offsets = [0, 0], sizes = [128, 128], strides = [1, 1]} : vector<128x384xbf16> to vector<128x128xbf16>
    %cst_65 = arith.constant dense<0.000000e+00> : vector<16x128xf32>
    %138 = tpu.matmul %136, %137, %cst_65 {dimension_numbers = #tpu.dot_dimension_numbers<[1], [0], [0], [1], [0, 0, 1, 1], [], []>} : vector<16x128xbf16>, vector<128x128xbf16>, vector<16x128xf32> -> vector<16x128xf32>
    %139 = vector.broadcast %129 : vector<1x128xf32> to vector<16x128xf32>
    %140 = arith.addf %138, %139 : vector<16x128xf32>
    %141 = arith.truncf %122 : vector<16x128xf32> to vector<16x128xbf16>
    %142 = vector.extract_strided_slice %125 {offsets = [0, 128], sizes = [128, 256], strides = [1, 1]} : vector<128x384xbf16> to vector<128x256xbf16>
    %cst_66 = arith.constant dense<0.000000e+00> : vector<16x256xf32>
    %143 = tpu.matmul %141, %142, %cst_66 {dimension_numbers = #tpu.dot_dimension_numbers<[1], [0], [0], [1], [0, 0, 1, 1], [], []>} : vector<16x128xbf16>, vector<128x256xbf16>, vector<16x256xf32> -> vector<16x256xf32>
    %144 = vector.extract_strided_slice %143 {offsets = [0, 0], sizes = [16, 128], strides = [1, 1]} : vector<16x256xf32> to vector<16x128xf32>
    %145 = vector.broadcast %131 : vector<1x128xf32> to vector<16x128xf32>
    %146 = arith.addf %144, %145 : vector<16x128xf32>
    %147 = vector.extract_strided_slice %143 {offsets = [0, 128], sizes = [16, 128], strides = [1, 1]} : vector<16x256xf32> to vector<16x128xf32>
    %148 = vector.broadcast %133 : vector<1x128xf32> to vector<16x128xf32>
    %149 = arith.addf %147, %148 : vector<16x128xf32>
    %cst_67 = arith.constant 0.000000e+00 : f32
    %150 = vector.broadcast %cst_67 : f32 to vector<16x128xf32>
    %151 = vector.broadcast %14 : vector<1x128xf32> to vector<16x128xf32>
    %152 = arith.mulf %140, %151 : vector<16x128xf32>
    %153 = arith.truncf %152 : vector<16x128xf32> to vector<16x128xbf16>
    %154 = arith.truncf %146 : vector<16x128xf32> to vector<16x128xbf16>
    %cst_68 = arith.constant dense<0.000000e+00> : vector<16x16xf32>
    %155 = tpu.matmul %153, %154, %cst_68 {dimension_numbers = #tpu.dot_dimension_numbers<[1], [1], [0], [0], [0, 0, 1, 0], [], []>} : vector<16x128xbf16>, vector<16x128xbf16>, vector<16x16xf32> -> vector<16x16xf32>
    %156 = arith.addf %155, %123 : vector<16x16xf32>
    %cst_69 = arith.constant dense<0xFF800000> : vector<16xf32>
    %157 = vector.multi_reduction <maximumf>, %156, %cst_69 [1] : vector<16x16xf32> to vector<16xf32>
    %158 = vector.shape_cast %157 : vector<16xf32> to vector<16x1xf32>
    %159 = vector.broadcast %158 : vector<16x1xf32> to vector<16x16xf32>
    %160 = arith.subf %156, %159 : vector<16x16xf32>
    %161 = math.exp %160 : vector<16x16xf32>
    %cst_70 = arith.constant dense<0.000000e+00> : vector<16xf32>
    %162 = vector.multi_reduction <add>, %161, %cst_70 [1] : vector<16x16xf32> to vector<16xf32>
    %163 = vector.shape_cast %162 : vector<16xf32> to vector<16x1xf32>
    %164 = tpu.reciprocal %163 {approx = true} : vector<16x1xf32> -> vector<16x1xf32>
    %165 = vector.broadcast %164 : vector<16x1xf32> to vector<16x16xf32>
    %166 = arith.mulf %161, %165 : vector<16x16xf32>
    %167 = arith.truncf %166 : vector<16x16xf32> to vector<16x16xbf16>
    %168 = arith.truncf %149 : vector<16x128xf32> to vector<16x128xbf16>
    %cst_71 = arith.constant dense<0.000000e+00> : vector<16x128xf32>
    %169 = tpu.matmul %167, %168, %cst_71 {dimension_numbers = #tpu.dot_dimension_numbers<[1], [0], [0], [1], [0, 0, 1, 1], [], []>} : vector<16x16xbf16>, vector<16x128xbf16>, vector<16x128xf32> -> vector<16x128xf32>
    %170 = vector.broadcast %14 : vector<1x128xf32> to vector<16x128xf32>
    %171 = arith.mulf %169, %170 : vector<16x128xf32>
    %172 = arith.addf %150, %171 : vector<16x128xf32>
    %173 = vector.broadcast %21 : vector<1x128xf32> to vector<16x128xf32>
    %174 = arith.mulf %140, %173 : vector<16x128xf32>
    %175 = arith.truncf %174 : vector<16x128xf32> to vector<16x128xbf16>
    %176 = arith.truncf %146 : vector<16x128xf32> to vector<16x128xbf16>
    %cst_72 = arith.constant dense<0.000000e+00> : vector<16x16xf32>
    %177 = tpu.matmul %175, %176, %cst_72 {dimension_numbers = #tpu.dot_dimension_numbers<[1], [1], [0], [0], [0, 0, 1, 0], [], []>} : vector<16x128xbf16>, vector<16x128xbf16>, vector<16x16xf32> -> vector<16x16xf32>
    %178 = arith.addf %177, %123 : vector<16x16xf32>
    %cst_73 = arith.constant dense<0xFF800000> : vector<16xf32>
    %179 = vector.multi_reduction <maximumf>, %178, %cst_73 [1] : vector<16x16xf32> to vector<16xf32>
    %180 = vector.shape_cast %179 : vector<16xf32> to vector<16x1xf32>
    %181 = vector.broadcast %180 : vector<16x1xf32> to vector<16x16xf32>
    %182 = arith.subf %178, %181 : vector<16x16xf32>
    %183 = math.exp %182 : vector<16x16xf32>
    %cst_74 = arith.constant dense<0.000000e+00> : vector<16xf32>
    %184 = vector.multi_reduction <add>, %183, %cst_74 [1] : vector<16x16xf32> to vector<16xf32>
    %185 = vector.shape_cast %184 : vector<16xf32> to vector<16x1xf32>
    %186 = tpu.reciprocal %185 {approx = true} : vector<16x1xf32> -> vector<16x1xf32>
    %187 = vector.broadcast %186 : vector<16x1xf32> to vector<16x16xf32>
    %188 = arith.mulf %183, %187 : vector<16x16xf32>
    %189 = arith.truncf %188 : vector<16x16xf32> to vector<16x16xbf16>
    %190 = arith.truncf %149 : vector<16x128xf32> to vector<16x128xbf16>
    %cst_75 = arith.constant dense<0.000000e+00> : vector<16x128xf32>
    %191 = tpu.matmul %189, %190, %cst_75 {dimension_numbers = #tpu.dot_dimension_numbers<[1], [0], [0], [1], [0, 0, 1, 1], [], []>} : vector<16x16xbf16>, vector<16x128xbf16>, vector<16x128xf32> -> vector<16x128xf32>
    %192 = vector.broadcast %21 : vector<1x128xf32> to vector<16x128xf32>
    %193 = arith.mulf %191, %192 : vector<16x128xf32>
    %194 = arith.addf %172, %193 : vector<16x128xf32>
    %195 = arith.truncf %194 : vector<16x128xf32> to vector<16x128xbf16>
    %cst_76 = arith.constant dense<0.000000e+00> : vector<16x128xf32>
    %196 = tpu.matmul %195, %127, %cst_76 {dimension_numbers = #tpu.dot_dimension_numbers<[1], [0], [0], [1], [0, 0, 1, 1], [], []>} : vector<16x128xbf16>, vector<128x128xbf16>, vector<16x128xf32> -> vector<16x128xf32>
    %197 = vector.broadcast %135 : vector<1x128xf32> to vector<16x128xf32>
    %198 = arith.addf %196, %197 : vector<16x128xf32>
    %199 = arith.addf %121, %198 : vector<16x128xf32>
    %c0_77 = arith.constant 0 : index
    %c10 = arith.constant 10 : index
    %c0_78 = arith.constant 0 : index
    %200 = vector.load %arg9[%c0_77, %c10, %c0_78] : memref<1x16x128xf32, #tpu.memory_space<vmem>>, vector<1x1x128xf32>
    %201 = vector.shape_cast %200 : vector<1x1x128xf32> to vector<1x128xf32>
    %c0_79 = arith.constant 0 : index
    %c11 = arith.constant 11 : index
    %c0_80 = arith.constant 0 : index
    %202 = vector.load %arg9[%c0_79, %c11, %c0_80] : memref<1x16x128xf32, #tpu.memory_space<vmem>>, vector<1x1x128xf32>
    %203 = vector.shape_cast %202 : vector<1x1x128xf32> to vector<1x128xf32>
    %cst_81 = arith.constant dense<0.000000e+00> : vector<16xf32>
    %204 = vector.multi_reduction <add>, %199, %cst_81 [1] : vector<16x128xf32> to vector<16xf32>
    %205 = vector.shape_cast %204 : vector<16xf32> to vector<16x1xf32>
    %cst_82 = arith.constant 3.125000e-02 : f32
    %206 = vector.broadcast %cst_82 : f32 to vector<16x1xf32>
    %207 = arith.mulf %205, %206 : vector<16x1xf32>
    %208 = arith.mulf %199, %199 : vector<16x128xf32>
    %cst_83 = arith.constant dense<0.000000e+00> : vector<16xf32>
    %209 = vector.multi_reduction <add>, %208, %cst_83 [1] : vector<16x128xf32> to vector<16xf32>
    %210 = vector.shape_cast %209 : vector<16xf32> to vector<16x1xf32>
    %cst_84 = arith.constant 3.125000e-02 : f32
    %211 = vector.broadcast %cst_84 : f32 to vector<16x1xf32>
    %212 = arith.mulf %210, %211 : vector<16x1xf32>
    %213 = arith.mulf %207, %207 : vector<16x1xf32>
    %214 = arith.subf %212, %213 : vector<16x1xf32>
    %215 = vector.broadcast %207 : vector<16x1xf32> to vector<16x128xf32>
    %216 = arith.subf %199, %215 : vector<16x128xf32>
    %cst_85 = arith.constant 9.99999974E-6 : f32
    %217 = vector.broadcast %cst_85 : f32 to vector<16x1xf32>
    %218 = arith.addf %214, %217 : vector<16x1xf32>
    %219 = math.rsqrt %218 : vector<16x1xf32>
    %220 = vector.broadcast %219 : vector<16x1xf32> to vector<16x128xf32>
    %221 = arith.mulf %216, %220 : vector<16x128xf32>
    %222 = vector.broadcast %201 : vector<1x128xf32> to vector<16x128xf32>
    %223 = arith.mulf %221, %222 : vector<16x128xf32>
    %224 = vector.broadcast %203 : vector<1x128xf32> to vector<16x128xf32>
    %225 = arith.addf %223, %224 : vector<16x128xf32>
    %226 = arith.truncf %225 : vector<16x128xf32> to vector<16x128xbf16>
    %c0_86 = arith.constant 0 : index
    %c0_87 = arith.constant 0 : index
    %c0_88 = arith.constant 0 : index
    %227 = vector.load %arg7[%c0_86, %c0_87, %c0_88] : memref<1x128x128xbf16, #tpu.memory_space<vmem>>, vector<1x128x128xbf16>
    %228 = vector.shape_cast %227 : vector<1x128x128xbf16> to vector<128x128xbf16>
    %cst_89 = arith.constant dense<0.000000e+00> : vector<16x128xf32>
    %229 = tpu.matmul %226, %228, %cst_89 {dimension_numbers = #tpu.dot_dimension_numbers<[1], [0], [0], [1], [0, 0, 1, 1], [], []>} : vector<16x128xbf16>, vector<128x128xbf16>, vector<16x128xf32> -> vector<16x128xf32>
    %c0_90 = arith.constant 0 : index
    %c14 = arith.constant 14 : index
    %c0_91 = arith.constant 0 : index
    %230 = vector.load %arg9[%c0_90, %c14, %c0_91] : memref<1x16x128xf32, #tpu.memory_space<vmem>>, vector<1x1x128xf32>
    %231 = vector.shape_cast %230 : vector<1x1x128xf32> to vector<1x128xf32>
    %232 = vector.broadcast %231 : vector<1x128xf32> to vector<16x128xf32>
    %233 = arith.addf %229, %232 : vector<16x128xf32>
    %cst_92 = arith.constant 0.000000e+00 : f32
    %234 = vector.broadcast %cst_92 : f32 to vector<16x128xf32>
    %235 = arith.maximumf %233, %234 : vector<16x128xf32>
    %236 = arith.truncf %235 : vector<16x128xf32> to vector<16x128xbf16>
    %c0_93 = arith.constant 0 : index
    %c0_94 = arith.constant 0 : index
    %c0_95 = arith.constant 0 : index
    %237 = vector.load %arg8[%c0_93, %c0_94, %c0_95] : memref<1x128x128xbf16, #tpu.memory_space<vmem>>, vector<1x128x128xbf16>
    %238 = vector.shape_cast %237 : vector<1x128x128xbf16> to vector<128x128xbf16>
    %cst_96 = arith.constant dense<0.000000e+00> : vector<16x128xf32>
    %239 = tpu.matmul %236, %238, %cst_96 {dimension_numbers = #tpu.dot_dimension_numbers<[1], [0], [0], [1], [0, 0, 1, 1], [], []>} : vector<16x128xbf16>, vector<128x128xbf16>, vector<16x128xf32> -> vector<16x128xf32>
    %c0_97 = arith.constant 0 : index
    %c15 = arith.constant 15 : index
    %c0_98 = arith.constant 0 : index
    %240 = vector.load %arg9[%c0_97, %c15, %c0_98] : memref<1x16x128xf32, #tpu.memory_space<vmem>>, vector<1x1x128xf32>
    %241 = vector.shape_cast %240 : vector<1x1x128xf32> to vector<1x128xf32>
    %242 = vector.broadcast %241 : vector<1x128xf32> to vector<16x128xf32>
    %243 = arith.addf %239, %242 : vector<16x128xf32>
    %244 = arith.addf %225, %243 : vector<16x128xf32>
    %c0_99 = arith.constant 0 : index
    %c12 = arith.constant 12 : index
    %c0_100 = arith.constant 0 : index
    %245 = vector.load %arg9[%c0_99, %c12, %c0_100] : memref<1x16x128xf32, #tpu.memory_space<vmem>>, vector<1x1x128xf32>
    %246 = vector.shape_cast %245 : vector<1x1x128xf32> to vector<1x128xf32>
    %c0_101 = arith.constant 0 : index
    %c13 = arith.constant 13 : index
    %c0_102 = arith.constant 0 : index
    %247 = vector.load %arg9[%c0_101, %c13, %c0_102] : memref<1x16x128xf32, #tpu.memory_space<vmem>>, vector<1x1x128xf32>
    %248 = vector.shape_cast %247 : vector<1x1x128xf32> to vector<1x128xf32>
    %cst_103 = arith.constant dense<0.000000e+00> : vector<16xf32>
    %249 = vector.multi_reduction <add>, %244, %cst_103 [1] : vector<16x128xf32> to vector<16xf32>
    %250 = vector.shape_cast %249 : vector<16xf32> to vector<16x1xf32>
    %cst_104 = arith.constant 3.125000e-02 : f32
    %251 = vector.broadcast %cst_104 : f32 to vector<16x1xf32>
    %252 = arith.mulf %250, %251 : vector<16x1xf32>
    %253 = arith.mulf %244, %244 : vector<16x128xf32>
    %cst_105 = arith.constant dense<0.000000e+00> : vector<16xf32>
    %254 = vector.multi_reduction <add>, %253, %cst_105 [1] : vector<16x128xf32> to vector<16xf32>
    %255 = vector.shape_cast %254 : vector<16xf32> to vector<16x1xf32>
    %cst_106 = arith.constant 3.125000e-02 : f32
    %256 = vector.broadcast %cst_106 : f32 to vector<16x1xf32>
    %257 = arith.mulf %255, %256 : vector<16x1xf32>
    %258 = arith.mulf %252, %252 : vector<16x1xf32>
    %259 = arith.subf %257, %258 : vector<16x1xf32>
    %260 = vector.broadcast %252 : vector<16x1xf32> to vector<16x128xf32>
    %261 = arith.subf %244, %260 : vector<16x128xf32>
    %cst_107 = arith.constant 9.99999974E-6 : f32
    %262 = vector.broadcast %cst_107 : f32 to vector<16x1xf32>
    %263 = arith.addf %259, %262 : vector<16x1xf32>
    %264 = math.rsqrt %263 : vector<16x1xf32>
    %265 = vector.broadcast %264 : vector<16x1xf32> to vector<16x128xf32>
    %266 = arith.mulf %261, %265 : vector<16x128xf32>
    %267 = vector.broadcast %246 : vector<1x128xf32> to vector<16x128xf32>
    %268 = arith.mulf %266, %267 : vector<16x128xf32>
    %269 = vector.broadcast %248 : vector<1x128xf32> to vector<16x128xf32>
    %270 = arith.addf %268, %269 : vector<16x128xf32>
    %c0_108 = arith.constant 0 : index
    %c0_109 = arith.constant 0 : index
    %271 = vector.load %arg14[%c0_108, %c0_109] : memref<16x128xf32, #tpu.memory_space<vmem>>, vector<16x128xf32>
    tpu.vector_store %arg14[%c0_108, %c0_109], %270 {strides = array<i32>} : memref<16x128xf32, #tpu.memory_space<vmem>>, vector<16x128xf32>,
    %c1_i32 = arith.constant 1 : i32
    %272 = arith.cmpi eq, %arg0, %c1_i32 : i32
    %273 = arith.extui %272 : i1 to i32
    %c0_i32_110 = arith.constant 0 : i32
    %274 = arith.cmpi ne, %273, %c0_i32_110 : i32
    scf.if %274 {
      %275 = arith.truncf %270 : vector<16x128xf32> to vector<16x128xbf16>
      %c0_111 = arith.constant 0 : index
      %c0_112 = arith.constant 0 : index
      %276 = vector.load %arg10[%c0_111, %c0_112] : memref<128x128xbf16, #tpu.memory_space<vmem>>, vector<128x128xbf16>
      %cst_113 = arith.constant dense<0.000000e+00> : vector<16x128xf32>
      %277 = tpu.matmul %275, %276, %cst_113 {dimension_numbers = #tpu.dot_dimension_numbers<[1], [0], [0], [1], [0, 0, 1, 1], [], []>} : vector<16x128xbf16>, vector<128x128xbf16>, vector<16x128xf32> -> vector<16x128xf32>
      %c0_114 = arith.constant 0 : index
      %c0_115 = arith.constant 0 : index
      %278 = vector.load %arg11[%c0_114, %c0_115] : memref<1x128xf32, #tpu.memory_space<vmem>>, vector<1x128xf32>
      %279 = vector.broadcast %278 : vector<1x128xf32> to vector<16x128xf32>
      %280 = arith.addf %277, %279 : vector<16x128xf32>
      %c0_116 = arith.constant 0 : index
      %c0_117 = arith.constant 0 : index
      %281 = vector.load %arg13[%c0_116, %c0_117] : memref<16x128xf32, #tpu.memory_space<vmem>>, vector<16x128xf32>
      tpu.vector_store %arg13[%c0_116, %c0_117], %280 {strides = array<i32>} : memref<16x128xf32, #tpu.memory_space<vmem>>, vector<16x128xf32>,
    } else {
    }
    return
  }
  func.func @transform_0(%arg0: i32) -> (i32, i32) {
    %c0_i32 = arith.constant 0 : i32
    %c0_i32_0 = arith.constant 0 : i32
    %c0_i32_1 = arith.constant 0 : i32
    return %c0_i32, %c0_i32_0 : i32, i32
  }
  func.func @transform_1(%arg0: i32) -> (i32, i32) {
    %c0_i32 = arith.constant 0 : i32
    %c0_i32_0 = arith.constant 0 : i32
    %c0_i32_1 = arith.constant 0 : i32
    return %c0_i32, %c0_i32_0 : i32, i32
  }
  func.func @transform_2(%arg0: i32) -> (i32, i32) {
    %c0_i32 = arith.constant 0 : i32
    %c0_i32_0 = arith.constant 0 : i32
    %c0_i32_1 = arith.constant 0 : i32
    return %c0_i32, %c0_i32_0 : i32, i32
  }
  func.func @transform_3(%arg0: i32) -> (i32, i32) {
    %c0_i32 = arith.constant 0 : i32
    %c0_i32_0 = arith.constant 0 : i32
    %c0_i32_1 = arith.constant 0 : i32
    return %c0_i32, %c0_i32_0 : i32, i32
  }
  func.func @transform_4(%arg0: i32) -> (i32, i32, i32, i32) {
    %c0_i32 = arith.constant 0 : i32
    %c0_i32_0 = arith.constant 0 : i32
    %c0_i32_1 = arith.constant 0 : i32
    %c0_i32_2 = arith.constant 0 : i32
    return %arg0, %c0_i32, %c0_i32_0, %c0_i32_1 : i32, i32, i32, i32
  }
  func.func @transform_5(%arg0: i32) -> (i32, i32, i32, i32) {
    %c0_i32 = arith.constant 0 : i32
    %c0_i32_0 = arith.constant 0 : i32
    %c0_i32_1 = arith.constant 0 : i32
    %c0_i32_2 = arith.constant 0 : i32
    return %arg0, %c0_i32, %c0_i32_0, %c0_i32_1 : i32, i32, i32, i32
  }
  func.func @transform_6(%arg0: i32) -> (i32, i32, i32) {
    %c0_i32 = arith.constant 0 : i32
    %c0_i32_0 = arith.constant 0 : i32
    %c0_i32_1 = arith.constant 0 : i32
    return %arg0, %c0_i32, %c0_i32_0 : i32, i32, i32
  }
  func.func @transform_7(%arg0: i32) -> (i32, i32, i32) {
    %c0_i32 = arith.constant 0 : i32
    %c0_i32_0 = arith.constant 0 : i32
    %c0_i32_1 = arith.constant 0 : i32
    return %arg0, %c0_i32, %c0_i32_0 : i32, i32, i32
  }
  func.func @transform_8(%arg0: i32) -> (i32, i32, i32) {
    %c0_i32 = arith.constant 0 : i32
    %c0_i32_0 = arith.constant 0 : i32
    %c0_i32_1 = arith.constant 0 : i32
    return %arg0, %c0_i32, %c0_i32_0 : i32, i32, i32
  }
  func.func @transform_9(%arg0: i32) -> (i32, i32) {
    %c0_i32 = arith.constant 0 : i32
    %c0_i32_0 = arith.constant 0 : i32
    %c0_i32_1 = arith.constant 0 : i32
    return %c0_i32, %c0_i32_0 : i32, i32
  }
  func.func @transform_10(%arg0: i32) -> (i32, i32) {
    %c0_i32 = arith.constant 0 : i32
    %c0_i32_0 = arith.constant 0 : i32
    %c0_i32_1 = arith.constant 0 : i32
    return %c0_i32, %c0_i32_0 : i32, i32
  }
  func.func @transform_11(%arg0: i32) -> (i32, i32, i32) {
    %c0_i32 = arith.constant 0 : i32
    %c0_i32_0 = arith.constant 0 : i32
    %c0_i32_1 = arith.constant 0 : i32
    return %arg0, %c0_i32, %c0_i32_0 : i32, i32, i32
  }
  func.func @transform_12(%arg0: i32) -> (i32, i32) {
    %c0_i32 = arith.constant 0 : i32
    %c0_i32_0 = arith.constant 0 : i32
    %c0_i32_1 = arith.constant 0 : i32
    return %c0_i32, %c0_i32_0 : i32, i32
  }
}

</mosaic_0001>

<llo_original>
// kernel: _forward_impl.1
$region0: #{_forward_impl.1}
  #allocation0 [shape = 'u32[]', space=smem, size = 0x4, offset = 0x4, fixed_abs, tag = 'smem constant byte address 0x4 - core index']
  #allocation1 [shape = 'u32[144,128]{1,0:T(1,128)}', space=vmem, size = 0x12000, scoped, tag = 'internal scratch']
  #allocation2 [shape = 'f32[16,128]{1,0:T(8,128)}', space=vmem, size = 0x2000, scoped, tag = 'scratch operand']
  %s0 = inlined_call_operand.vmem [shape: f32[16,128], index: 0, kind: input, shape index: {}]
  %s1 = inlined_call_operand.vmem [shape: f32[16,128], index: 1, kind: input, shape index: {}]
  %s2 = inlined_call_operand.vmem [shape: f32[16,16], index: 2, kind: input, shape index: {}, may-alias: {2,3}]
  %s3 = inlined_call_operand.vmem [shape: f32[16,16], index: 3, kind: input, shape index: {}, may-alias: {2,3}]
  %s4 = inlined_call_operand.hbm [shape: bf16[2,2,128,384], index: 4, kind: input, shape index: {}]
  %s5 = inlined_call_operand.vmem [shape: bf16[2,2,128,128], index: 5, kind: input, shape index: {}]
  %s6 = inlined_call_operand.hbm [shape: bf16[2,128,128], index: 6, kind: input, shape index: {}]
  %s7 = inlined_call_operand.hbm [shape: bf16[2,128,128], index: 7, kind: input, shape index: {}]
  %s8 = inlined_call_operand.hbm [shape: f32[2,16,128], index: 8, kind: input, shape index: {}]
  %s9 = inlined_call_operand.vmem [shape: bf16[128,128], index: 9, kind: input, shape index: {}]
  %s10 = inlined_call_operand.vmem [shape: f32[1,128], index: 10, kind: input, shape index: {}]
  %s11 = inlined_call_operand.vmem [shape: f32[2,16,128], index: 11, kind: output, shape index: {0}]
  %s12 = inlined_call_operand.vmem [shape: f32[16,128], index: 12, kind: output, shape index: {1}]
  %13 = xla_tuple %s11, %s12
  %s14 = sld [smem:[#allocation0]]
  $region109: #{_forward_impl.1} parent=0
    _
  %s16 = ssub.s32 1, %s14
  %s17 = scalar_select 0, %s16, %s14
  $region1: #{_forward_impl.1} parent=0
    #allocation3 [shape = 'u8[393216]{0}', space=vmem, size = 0x60000, scoped, tag = 'input window, operand 4']
    #allocation4 [shape = 's32[2]{0}', space=sflag, size = 0x8, scoped, tag = 'scoped memory for _forward_impl.1']
    #allocation5 [shape = 'u8[65536]{0}', space=vmem, size = 0x10000, scoped, tag = 'input window, operand 6']
    #allocation6 [shape = 's32[2]{0}', space=sflag, size = 0x8, scoped, tag = 'scoped memory for _forward_impl.1']
    #allocation7 [shape = 'u8[65536]{0}', space=vmem, size = 0x10000, scoped, tag = 'input window, operand 7']
    #allocation8 [shape = 'u8[16384]{0}', space=vmem, size = 0x4000, scoped, tag = 'input window, operand 8']
    #allocation9 [shape = 's32[2]{0}', space=sflag, size = 0x8, scoped, tag = 'scoped memory for _forward_impl.1']
    %18 = vsyncpa [#allocation4], 0
    %s19 = scalar_lea.sflag [#allocation4], 1
    %20 = vsyncpa %s19, 0
    %21 = vsyncpa [#allocation6], 0
    %s22 = scalar_lea.sflag [#allocation6], 1
    %23 = vsyncpa %s22, 0
    %24 = vsyncpa [#allocation9], 0
    %s25 = scalar_lea.sflag [#allocation9], 1
    %26 = vsyncpa %s25, 0
    loop: start=0, step=1, limit=4
    $region2: #{_forward_impl.1} parent=1 // loop_pre_header
      _
    $region3: #{_forward_impl.1} parent=1 // loop_header
      %s28 = sphi 0, %s32
      %p29 = scmp.ge.s32.totalorder %s28, 4
      %s36 = sphi 0, %s36
      %s38 = sphi 0, %s36
      %s39 = sphi 0, %s38
      %s53 = sphi 0, %s39
      %s57 = sphi 0, %s57
      %s59 = sphi 0, %s57
      %s60 = sphi 0, %s59
      %s74 = sphi 0, %s60
      %s78 = sphi 0, %s78
      %s80 = sphi 0, %s78
      %s81 = sphi 0, %s80
      %s95 = sphi 0, %s81
      %s99 = sphi 0, %s99
      %s101 = sphi 0, %s99
      %s102 = sphi 0, %s101
      %s116 = sphi 0, %s102
      %s122 = sphi 0, %s124
      %s125 = sphi 0, %s122
      %s126 = sphi 0, %s125
      %s142 = sphi 0, %s126
      %s148 = sphi 0, %s150
      %s151 = sphi 0, %s148
      %s152 = sphi 0, %s151
      %s168 = sphi 0, %s152
      %s174 = sphi 0, %s176
      %s177 = sphi 0, %s174
      %s178 = sphi 0, %s177
      %s194 = sphi 0, %s178
      %s200 = sphi 0, %s202
      %s203 = sphi 0, %s200
      %s204 = sphi 0, %s203
      %s220 = sphi 0, %s204
      %s226 = sphi 0, %s228
      %s229 = sphi 0, %s226
      %s230 = sphi 0, %s229
      %s246 = sphi 0, %s230
      %s250 = sphi 0, %s250
      %s252 = sphi 0, %s250
      %s253 = sphi 0, %s252
      %s267 = sphi 0, %s253
      %s271 = sphi 0, %s271
      %s273 = sphi 0, %s271
      %s274 = sphi 0, %s273
      %s288 = sphi 0, %s274
      %s294 = sphi 0, %s296
      %s297 = sphi 0, %s294
      %s298 = sphi 0, %s297
      %s314 = sphi 0, %s298
      %s318 = sphi 0, %s318
      %s320 = sphi 0, %s318
      %s321 = sphi 0, %s320
      %s335 = sphi 0, %s321
    $region4: #{_forward_impl.1} parent=1 // loop_header_branch
      %31 = sbr.rel (%p29) target = $region8
    $region5: #{_forward_impl.1} parent=1 // loop_body
      %s33 = ssub.s32 %s28, 1
      %s34 = ssub.s32 %s28, 2
      %s35 = sadd.s32 %s28, 1
      %s37 = sadd.s32 %s36, 1
      %p40 = scmp.eq.s32.totalorder %s28, 1
      %p41 = scmp.ne.s32.totalorder %s36, %s38
      %p42 = scmp.eq.s32.totalorder %s28, 0
      %p43 = por %p41, %p42
      %p44 = scmp.ne.s32.totalorder %s36, %s38
      %p45 = scmp.eq.s32.totalorder %s33, 1
      %p46 = por %p44, %p45
      %p47 = scmp.ne.s32.totalorder %s38, %s39
      %p48 = scmp.eq.s32.totalorder %s33, 0
      %p49 = por %p47, %p48
      %p50 = scmp.ne.s32.totalorder %s38, %s39
      %p51 = scmp.eq.s32.totalorder %s34, 1
      %p52 = por %p50, %p51
      %p54 = scmp.ne.s32.totalorder %s39, %s53
      %p55 = scmp.eq.s32.totalorder %s34, 0
      %p56 = por %p54, %p55
      %s58 = sadd.s32 %s57, 1
      %p61 = scmp.eq.s32.totalorder %s28, 1
      %p62 = scmp.ne.s32.totalorder %s57, %s59
      %p63 = scmp.eq.s32.totalorder %s28, 0
      %p64 = por %p62, %p63
      %p65 = scmp.ne.s32.totalorder %s57, %s59
      %p66 = scmp.eq.s32.totalorder %s33, 1
      %p67 = por %p65, %p66
      %p68 = scmp.ne.s32.totalorder %s59, %s60
      %p69 = scmp.eq.s32.totalorder %s33, 0
      %p70 = por %p68, %p69
      %p71 = scmp.ne.s32.totalorder %s59, %s60
      %p72 = scmp.eq.s32.totalorder %s34, 1
      %p73 = por %p71, %p72
      %p75 = scmp.ne.s32.totalorder %s60, %s74
      %p76 = scmp.eq.s32.totalorder %s34, 0
      %p77 = por %p75, %p76
      %s79 = sadd.s32 %s78, 1
      %p82 = scmp.eq.s32.totalorder %s28, 1
      %p83 = scmp.ne.s32.totalorder %s78, %s80
      %p84 = scmp.eq.s32.totalorder %s28, 0
      %p85 = por %p83, %p84
      %p86 = scmp.ne.s32.totalorder %s78, %s80
      %p87 = scmp.eq.s32.totalorder %s33, 1
      %p88 = por %p86, %p87
      %p89 = scmp.ne.s32.totalorder %s80, %s81
      %p90 = scmp.eq.s32.totalorder %s33, 0
      %p91 = por %p89, %p90
      %p92 = scmp.ne.s32.totalorder %s80, %s81
      %p93 = scmp.eq.s32.totalorder %s34, 1
      %p94 = por %p92, %p93
      %p96 = scmp.ne.s32.totalorder %s81, %s95
      %p97 = scmp.eq.s32.totalorder %s34, 0
      %p98 = por %p96, %p97
      %s100 = sadd.s32 %s99, 1
      %p103 = scmp.eq.s32.totalorder %s28, 1
      %p104 = scmp.ne.s32.totalorder %s99, %s101
      %p105 = scmp.eq.s32.totalorder %s28, 0
      %p106 = por %p104, %p105
      %p107 = scmp.ne.s32.totalorder %s99, %s101
      %p108 = scmp.eq.s32.totalorder %s33, 1
      %p109 = por %p107, %p108
      %p110 = scmp.ne.s32.totalorder %s101, %s102
      %p111 = scmp.eq.s32.totalorder %s33, 0
      %p112 = por %p110, %p111
      %p113 = scmp.ne.s32.totalorder %s101, %s102
      %p114 = scmp.eq.s32.totalorder %s34, 1
      %p115 = por %p113, %p114
      %p117 = scmp.ne.s32.totalorder %s102, %s116
      %p118 = scmp.eq.s32.totalorder %s34, 0
      %p119 = por %p117, %p118
      %s120 = ssub.s32 %s28, %s35
      %p121 = scmp.eq.s32.totalorder %s120, 0
      %s123 = sadd.s32 %s122, 1
      %s124 = scalar_select %p121, %s122, %s123
      %p127 = pneg %p121
      %p128 = scmp.eq.s32.totalorder %s28, 1
      %p129 = por %p127, %p128
      %p130 = scmp.ne.s32.totalorder %s122, %s125
      %p131 = scmp.eq.s32.totalorder %s28, 0
      %p132 = por %p130, %p131
      %p133 = scmp.ne.s32.totalorder %s122, %s125
      %p134 = scmp.eq.s32.totalorder %s33, 1
      %p135 = por %p133, %p134
      %p136 = scmp.ne.s32.totalorder %s125, %s126
      %p137 = scmp.eq.s32.totalorder %s33, 0
      %p138 = por %p136, %p137
      %p139 = scmp.ne.s32.totalorder %s125, %s126
      %p140 = scmp.eq.s32.totalorder %s34, 1
      %p141 = por %p139, %p140
      %p143 = scmp.ne.s32.totalorder %s126, %s142
      %p144 = scmp.eq.s32.totalorder %s34, 0
      %p145 = por %p143, %p144
      %s146 = ssub.s32 %s28, %s35
      %p147 = scmp.eq.s32.totalorder %s146, 0
      %s149 = sadd.s32 %s148, 1
      %s150 = scalar_select %p147, %s148, %s149
      %p153 = pneg %p147
      %p154 = scmp.eq.s32.totalorder %s28, 1
      %p155 = por %p153, %p154
      %p156 = scmp.ne.s32.totalorder %s148, %s151
      %p157 = scmp.eq.s32.totalorder %s28, 0
      %p158 = por %p156, %p157
      %p159 = scmp.ne.s32.totalorder %s148, %s151
      %p160 = scmp.eq.s32.totalorder %s33, 1
      %p161 = por %p159, %p160
      %p162 = scmp.ne.s32.totalorder %s151, %s152
      %p163 = scmp.eq.s32.totalorder %s33, 0
      %p164 = por %p162, %p163
      %p165 = scmp.ne.s32.totalorder %s151, %s152
      %p166 = scmp.eq.s32.totalorder %s34, 1
      %p167 = por %p165, %p166
      %p169 = scmp.ne.s32.totalorder %s152, %s168
      %p170 = scmp.eq.s32.totalorder %s34, 0
      %p171 = por %p169, %p170
      %s172 = ssub.s32 %s28, %s35
      %p173 = scmp.eq.s32.totalorder %s172, 0
      %s175 = sadd.s32 %s174, 1
      %s176 = scalar_select %p173, %s174, %s175
      %p179 = pneg %p173
      %p180 = scmp.eq.s32.totalorder %s28, 1
      %p181 = por %p179, %p180
      %p182 = scmp.ne.s32.totalorder %s174, %s177
      %p183 = scmp.eq.s32.totalorder %s28, 0
      %p184 = por %p182, %p183
      %p185 = scmp.ne.s32.totalorder %s174, %s177
      %p186 = scmp.eq.s32.totalorder %s33, 1
      %p187 = por %p185, %p186
      %p188 = scmp.ne.s32.totalorder %s177, %s178
      %p189 = scmp.eq.s32.totalorder %s33, 0
      %p190 = por %p188, %p189
      %p191 = scmp.ne.s32.totalorder %s177, %s178
      %p192 = scmp.eq.s32.totalorder %s34, 1
      %p193 = por %p191, %p192
      %p195 = scmp.ne.s32.totalorder %s178, %s194
      %p196 = scmp.eq.s32.totalorder %s34, 0
      %p197 = por %p195, %p196
      %s198 = ssub.s32 %s28, %s35
      %p199 = scmp.eq.s32.totalorder %s198, 0
      %s201 = sadd.s32 %s200, 1
      %s202 = scalar_select %p199, %s200, %s201
      %p205 = pneg %p199
      %p206 = scmp.eq.s32.totalorder %s28, 1
      %p207 = por %p205, %p206
      %p208 = scmp.ne.s32.totalorder %s200, %s203
      %p209 = scmp.eq.s32.totalorder %s28, 0
      %p210 = por %p208, %p209
      %p211 = scmp.ne.s32.totalorder %s200, %s203
      %p212 = scmp.eq.s32.totalorder %s33, 1
      %p213 = por %p211, %p212
      %p214 = scmp.ne.s32.totalorder %s203, %s204
      %p215 = scmp.eq.s32.totalorder %s33, 0
      %p216 = por %p214, %p215
      %p217 = scmp.ne.s32.totalorder %s203, %s204
      %p218 = scmp.eq.s32.totalorder %s34, 1
      %p219 = por %p217, %p218
      %p221 = scmp.ne.s32.totalorder %s204, %s220
      %p222 = scmp.eq.s32.totalorder %s34, 0
      %p223 = por %p221, %p222
      %s224 = ssub.s32 %s28, %s35
      %p225 = scmp.eq.s32.totalorder %s224, 0
      %s227 = sadd.s32 %s226, 1
      %s228 = scalar_select %p225, %s226, %s227
      %p231 = pneg %p225
      %p232 = scmp.eq.s32.totalorder %s28, 1
      %p233 = por %p231, %p232
      %p234 = scmp.ne.s32.totalorder %s226, %s229
      %p235 = scmp.eq.s32.totalorder %s28, 0
      %p236 = por %p234, %p235
      %p237 = scmp.ne.s32.totalorder %s226, %s229
      %p238 = scmp.eq.s32.totalorder %s33, 1
      %p239 = por %p237, %p238
      %p240 = scmp.ne.s32.totalorder %s229, %s230
      %p241 = scmp.eq.s32.totalorder %s33, 0
      %p242 = por %p240, %p241
      %p243 = scmp.ne.s32.totalorder %s229, %s230
      %p244 = scmp.eq.s32.totalorder %s34, 1
      %p245 = por %p243, %p244
      %p247 = scmp.ne.s32.totalorder %s230, %s246
      %p248 = scmp.eq.s32.totalorder %s34, 0
      %p249 = por %p247, %p248
      %s251 = sadd.s32 %s250, 1
      %p254 = scmp.eq.s32.totalorder %s28, 1
      %p255 = scmp.ne.s32.totalorder %s250, %s252
      %p256 = scmp.eq.s32.totalorder %s28, 0
      %p257 = por %p255, %p256
      %p258 = scmp.ne.s32.totalorder %s250, %s252
      %p259 = scmp.eq.s32.totalorder %s33, 1
      %p260 = por %p258, %p259
      %p261 = scmp.ne.s32.totalorder %s252, %s253
      %p262 = scmp.eq.s32.totalorder %s33, 0
      %p263 = por %p261, %p262
      %p264 = scmp.ne.s32.totalorder %s252, %s253
      %p265 = scmp.eq.s32.totalorder %s34, 1
      %p266 = por %p264, %p265
      %p268 = scmp.ne.s32.totalorder %s253, %s267
      %p269 = scmp.eq.s32.totalorder %s34, 0
      %p270 = por %p268, %p269
      %s272 = sadd.s32 %s271, 1
      %p275 = scmp.eq.s32.totalorder %s28, 1
      %p276 = scmp.ne.s32.totalorder %s271, %s273
      %p277 = scmp.eq.s32.totalorder %s28, 0
      %p278 = por %p276, %p277
      %p279 = scmp.ne.s32.totalorder %s271, %s273
      %p280 = scmp.eq.s32.totalorder %s33, 1
      %p281 = por %p279, %p280
      %p282 = scmp.ne.s32.totalorder %s273, %s274
      %p283 = scmp.eq.s32.totalorder %s33, 0
      %p284 = por %p282, %p283
      %p285 = scmp.ne.s32.totalorder %s273, %s274
      %p286 = scmp.eq.s32.totalorder %s34, 1
      %p287 = por %p285, %p286
      %p289 = scmp.ne.s32.totalorder %s274, %s288
      %p290 = scmp.eq.s32.totalorder %s34, 0
      %p291 = por %p289, %p290
      %s292 = ssub.s32 %s28, %s35
      %p293 = scmp.eq.s32.totalorder %s292, 0
      %s295 = sadd.s32 %s294, 1
      %s296 = scalar_select %p293, %s294, %s295
      %p299 = pneg %p293
      %p300 = scmp.eq.s32.totalorder %s28, 1
      %p301 = por %p299, %p300
      %p302 = scmp.ne.s32.totalorder %s294, %s297
      %p303 = scmp.eq.s32.totalorder %s28, 0
      %p304 = por %p302, %p303
      %p305 = scmp.ne.s32.totalorder %s294, %s297
      %p306 = scmp.eq.s32.totalorder %s33, 1
      %p307 = por %p305, %p306
      %p308 = scmp.ne.s32.totalorder %s297, %s298
      %p309 = scmp.eq.s32.totalorder %s33, 0
      %p310 = por %p308, %p309
      %p311 = scmp.ne.s32.totalorder %s297, %s298
      %p312 = scmp.eq.s32.totalorder %s34, 1
      %p313 = por %p311, %p312
      %p315 = scmp.ne.s32.totalorder %s298, %s314
      %p316 = scmp.eq.s32.totalorder %s34, 0
      %p317 = por %p315, %p316
      %s319 = sadd.s32 %s318, 1
      %p322 = scmp.eq.s32.totalorder %s28, 1
      %p323 = scmp.ne.s32.totalorder %s318, %s320
      %p324 = scmp.eq.s32.totalorder %s28, 0
      %p325 = por %p323, %p324
      %p326 = scmp.ne.s32.totalorder %s318, %s320
      %p327 = scmp.eq.s32.totalorder %s33, 1
      %p328 = por %p326, %p327
      %p329 = scmp.ne.s32.totalorder %s320, %s321
      %p330 = scmp.eq.s32.totalorder %s33, 0
      %p331 = por %p329, %p330
      %p332 = scmp.ne.s32.totalorder %s320, %s321
      %p333 = scmp.eq.s32.totalorder %s34, 1
      %p334 = por %p332, %p333
      %p336 = scmp.ne.s32.totalorder %s321, %s335
      %p337 = scmp.eq.s32.totalorder %s34, 0
      %p338 = por %p336, %p337
      %p339 = scmp.le.s32.totalorder 1, %s28
      %p340 = scmp.lt.s32.totalorder %s28, 3
      %p341 = pnand %p339, %p340
      %p342 = pneg %p341
      // Predicated region
      $region9: #{_forward_impl.1} parent=5 // pred_check
        _
      $region10: #{_forward_impl.1} parent=5 // pred_check_branch
        %344 = sbr.rel (%p341) target = $region12
      $region11: #{_forward_impl.1} parent=5 // pred_region
        %s345 = ssub.s32 %s28, 1
        // Predicated region
        $region13: #{_forward_impl.1} parent=11 // pred_check
          %p346 = pneg %p49
        $region14: #{_forward_impl.1} parent=11 // pred_check_branch
          %348 = sbr.rel (%p346) target = $region16
        $region15: #{_forward_impl.1} parent=11 // pred_region
          _
        $region16: #{_forward_impl.1} parent=11 // pred_fallthru
          _
        // Predicated region
        $region17: #{_forward_impl.1} parent=11 // pred_check
          %p349 = pneg %p70
        $region18: #{_forward_impl.1} parent=11 // pred_check_branch
          %351 = sbr.rel (%p349) target = $region20
        $region19: #{_forward_impl.1} parent=11 // pred_region
          _
        $region20: #{_forward_impl.1} parent=11 // pred_fallthru
          _
        // Predicated region
        $region21: #{_forward_impl.1} parent=11 // pred_check
          %p352 = pneg %p91
        $region22: #{_forward_impl.1} parent=11 // pred_check_branch
          %354 = sbr.rel (%p352) target = $region24
        $region23: #{_forward_impl.1} parent=11 // pred_region
          _
        $region24: #{_forward_impl.1} parent=11 // pred_fallthru
          _
        // Predicated region
        $region25: #{_forward_impl.1} parent=11 // pred_check
          %p355 = pneg %p112
        $region26: #{_forward_impl.1} parent=11 // pred_check_branch
          %357 = sbr.rel (%p355) target = $region28
        $region27: #{_forward_impl.1} parent=11 // pred_region
          _
        $region28: #{_forward_impl.1} parent=11 // pred_fallthru
          _
        // Predicated region
        $region29: #{_forward_impl.1} parent=11 // pred_check
          %p358 = pneg %p263
        $region30: #{_forward_impl.1} parent=11 // pred_check_branch
          %360 = sbr.rel (%p358) target = $region32
        $region31: #{_forward_impl.1} parent=11 // pred_region
          _
        $region32: #{_forward_impl.1} parent=11 // pred_fallthru
          _
        // Predicated region
        $region33: #{_forward_impl.1} parent=11 // pred_check
          %p361 = pneg %p284
        $region34: #{_forward_impl.1} parent=11 // pred_check_branch
          %363 = sbr.rel (%p361) target = $region36
        $region35: #{_forward_impl.1} parent=11 // pred_region
          _
        $region36: #{_forward_impl.1} parent=11 // pred_fallthru
          _
      $region12: #{_forward_impl.1} parent=5 // pred_fallthru
        _
      %p364 = scmp.lt.s32.totalorder %s28, 2
      // Predicated region
      $region37: #{_forward_impl.1} parent=5 // pred_check
        %p365 = pneg %p364
      $region38: #{_forward_impl.1} parent=5 // pred_check_branch
        %367 = sbr.rel (%p365) target = $region40
      $region39: #{_forward_impl.1} parent=5 // pred_region
        // Predicated region
        $region41: #{_forward_impl.1} parent=39 // pred_check
          %p368 = pneg %p132
        $region42: #{_forward_impl.1} parent=39 // pred_check_branch
          %370 = sbr.rel (%p368) target = $region44
        $region43: #{_forward_impl.1} parent=39 // pred_region
          %s371 = sand.u32 %s122, 1
          %s372 = scalar_lea.sflag [#allocation4], %s371
          %s373 = sand.u32 %s122, 1
          %s374 = smul.addr %s373, 384
          %s375 = scalar_lea.vmem [#allocation3], %s374
          %s377 = ssub.s32 6144, 6144
          %378 = vsyncadd %s372, %s377
          %s379 = smul.addr %s28, 96
          %s380 = smul.addr %s379, 64
          %s381 = scalar_lea.hbm %s4, %s380
          %s382 = sshll.u32 %s375, 4
          %s383 = int_to_ptr.vmem [resolvable:$true] %s382
          %388 = dma.hbm_to_vmem [thread:$0]  %s381, 6144, %s383, %s372, 192, 192, 12
        $region44: #{_forward_impl.1} parent=39 // pred_fallthru
          _
        // Predicated region
        $region45: #{_forward_impl.1} parent=39 // pred_check
          %p389 = pneg %p158
        $region46: #{_forward_impl.1} parent=39 // pred_check_branch
          %391 = sbr.rel (%p389) target = $region48
        $region47: #{_forward_impl.1} parent=39 // pred_region
          %p392 = scmp.lt.s32.totalorder %s28, 1
          %s393 = scalar_select %p392, %s28, 1
          %s394 = smul.addr %s393, 32
          %s395 = smul.addr %s394, 4
          %s396 = scalar_lea.vmem %s5, %s395
        $region48: #{_forward_impl.1} parent=39 // pred_fallthru
          _
        // Predicated region
        $region49: #{_forward_impl.1} parent=39 // pred_check
          %p397 = pneg %p184
        $region50: #{_forward_impl.1} parent=39 // pred_check_branch
          %399 = sbr.rel (%p397) target = $region52
        $region51: #{_forward_impl.1} parent=39 // pred_region
          %s400 = sand.u32 %s28, 1
          %s401 = scalar_lea.sflag [#allocation6], %s400
          %s402 = sand.u32 %s174, 1
          %s403 = smul.addr %s402, 64
          %s404 = scalar_lea.vmem [#allocation5], %s403
          %s406 = ssub.s32 1024, 1024
          %407 = vsyncadd %s401, %s406
          %s408 = smul.addr %s28, 16
          %s409 = smul.addr %s408, 64
          %s410 = scalar_lea.hbm %s6, %s409
          %s411 = sshll.u32 %s404, 4
          %s412 = int_to_ptr.vmem [resolvable:$true] %s411
          %417 = dma.hbm_to_vmem [thread:$0]  %s410, 1024, %s412, %s401, 64, 64, 4
        $region52: #{_forward_impl.1} parent=39 // pred_fallthru
          _
        // Predicated region
        $region53: #{_forward_impl.1} parent=39 // pred_check
          %p418 = pneg %p210
        $region54: #{_forward_impl.1} parent=39 // pred_check_branch
          %420 = sbr.rel (%p418) target = $region56
        $region55: #{_forward_impl.1} parent=39 // pred_region
          %s421 = sand.u32 %s28, 1
          %s422 = scalar_lea.sflag [#allocation6], %s421
          %s423 = sand.u32 %s200, 1
          %s424 = smul.addr %s423, 64
          %s425 = scalar_lea.vmem [#allocation7], %s424
          %s427 = ssub.s32 1024, 1024
          %428 = vsyncadd %s422, %s427
          %s429 = smul.addr %s28, 16
          %s430 = smul.addr %s429, 64
          %s431 = scalar_lea.hbm %s7, %s430
          %s432 = sshll.u32 %s425, 4
          %s433 = int_to_ptr.vmem [resolvable:$true] %s432
          %438 = dma.hbm_to_vmem [thread:$0]  %s431, 1024, %s433, %s422, 64, 64, 4
        $region56: #{_forward_impl.1} parent=39 // pred_fallthru
          _
        // Predicated region
        $region57: #{_forward_impl.1} parent=39 // pred_check
          %p439 = pneg %p236
        $region58: #{_forward_impl.1} parent=39 // pred_check_branch
          %441 = sbr.rel (%p439) target = $region60
        $region59: #{_forward_impl.1} parent=39 // pred_region
          %s442 = sand.u32 %s226, 1
          %s443 = scalar_lea.sflag [#allocation9], %s442
          %s444 = sand.u32 %s226, 1
          %s445 = smul.addr %s444, 16
          %s446 = scalar_lea.vmem [#allocation8], %s445
          %s448 = ssub.s32 256, 256
          %449 = vsyncadd %s443, %s448
          %s450 = smul.addr %s28, 2
          %s451 = smul.addr %s450, 128
          %s452 = scalar_lea.hbm %s8, %s451
          %s453 = sshll.u32 %s446, 4
          %s454 = int_to_ptr.vmem [resolvable:$true] %s453
          %459 = dma.hbm_to_vmem [thread:$0]  %s452, 256, %s454, %s443, 128, 128, 8
        $region60: #{_forward_impl.1} parent=39 // pred_fallthru
          _
      $region40: #{_forward_impl.1} parent=5 // pred_fallthru
        _
      %p460 = scmp.le.s32.totalorder 1, %s28
      %p461 = scmp.lt.s32.totalorder %s28, 3
      %p462 = pnand %p460, %p461
      %p463 = pneg %p462
      // Predicated region
      $region61: #{_forward_impl.1} parent=5 // pred_check
        _
      $region62: #{_forward_impl.1} parent=5 // pred_check_branch
        %465 = sbr.rel (%p462) target = $region64
      $region63: #{_forward_impl.1} parent=5 // pred_region
        %s466 = ssub.s32 %s28, 1
        %s467 = sand.u32 %s125, 1
        %s468 = scalar_lea.sflag [#allocation4], %s467
        %s469 = sand.u32 %s125, 1
        %s470 = smul.addr %s469, 384
        %s471 = scalar_lea.vmem [#allocation3], %s470
        // Predicated region
        $region65: #{_forward_impl.1} parent=63 // pred_check
          %p472 = pneg %p138
        $region66: #{_forward_impl.1} parent=63 // pred_check_branch
          %474 = sbr.rel (%p472) target = $region68
        $region67: #{_forward_impl.1} parent=63 // pred_region
          %475 = dma.done %s468, 6144
        $region68: #{_forward_impl.1} parent=63 // pred_fallthru
          _
        %s476 = sand.u32 %s33, 1
        %s477 = scalar_lea.sflag [#allocation6], %s476
        %s478 = sand.u32 %s177, 1
        %s479 = smul.addr %s478, 64
        %s480 = scalar_lea.vmem [#allocation5], %s479
        // Predicated region
        $region69: #{_forward_impl.1} parent=63 // pred_check
          %p481 = pneg %p190
        $region70: #{_forward_impl.1} parent=63 // pred_check_branch
          %483 = sbr.rel (%p481) target = $region72
        $region71: #{_forward_impl.1} parent=63 // pred_region
          %484 = dma.done %s477, 1024
        $region72: #{_forward_impl.1} parent=63 // pred_fallthru
          _
        %s485 = sand.u32 %s33, 1
        %s486 = scalar_lea.sflag [#allocation6], %s485
        %s487 = sand.u32 %s203, 1
        %s488 = smul.addr %s487, 64
        %s489 = scalar_lea.vmem [#allocation7], %s488
        // Predicated region
        $region73: #{_forward_impl.1} parent=63 // pred_check
          %p490 = pneg %p216
        $region74: #{_forward_impl.1} parent=63 // pred_check_branch
          %492 = sbr.rel (%p490) target = $region76
        $region75: #{_forward_impl.1} parent=63 // pred_region
          %493 = dma.done %s486, 1024
        $region76: #{_forward_impl.1} parent=63 // pred_fallthru
          _
        %s494 = sand.u32 %s229, 1
        %s495 = scalar_lea.sflag [#allocation9], %s494
        %s496 = sand.u32 %s229, 1
        %s497 = smul.addr %s496, 16
        %s498 = scalar_lea.vmem [#allocation8], %s497
        // Predicated region
        $region77: #{_forward_impl.1} parent=63 // pred_check
          %p499 = pneg %p242
        $region78: #{_forward_impl.1} parent=63 // pred_check_branch
          %501 = sbr.rel (%p499) target = $region80
        $region79: #{_forward_impl.1} parent=63 // pred_region
          %502 = dma.done %s495, 256
        $region80: #{_forward_impl.1} parent=63 // pred_fallthru
          _
        %p503 = pneg %p49
        %p504 = pneg %p46
        %p505 = pneg %p70
        %p506 = pneg %p67
        %p507 = pneg %p91
        %p508 = pneg %p88
        %p509 = pneg %p112
        %p510 = pneg %p109
        %s511 = sand.u32 %s125, 1
        %s512 = scalar_lea.sflag [#allocation4], %s511
        %s513 = sand.u32 %s125, 1
        %s514 = smul.addr %s513, 384
        %s515 = scalar_lea.vmem [#allocation3], %s514
        %p516 = pneg %p138
        %p517 = pneg %p135
        %p518 = scmp.lt.s32.totalorder %s33, 1
        %s519 = scalar_select %p518, %s33, 1
        %s520 = smul.addr %s519, 32
        %s521 = smul.addr %s520, 4
        %s522 = scalar_lea.vmem %s5, %s521
        %p523 = pneg %p164
        %p524 = pneg %p161
        %s525 = sand.u32 %s33, 1
        %s526 = scalar_lea.sflag [#allocation6], %s525
        %s527 = sand.u32 %s177, 1
        %s528 = smul.addr %s527, 64
        %s529 = scalar_lea.vmem [#allocation5], %s528
        %p530 = pneg %p190
        %p531 = pneg %p187
        %s532 = sand.u32 %s33, 1
        %s533 = scalar_lea.sflag [#allocation6], %s532
        %s534 = sand.u32 %s203, 1
        %s535 = smul.addr %s534, 64
        %s536 = scalar_lea.vmem [#allocation7], %s535
        %p537 = pneg %p216
        %p538 = pneg %p213
        %s539 = sand.u32 %s229, 1
        %s540 = scalar_lea.sflag [#allocation9], %s539
        %s541 = sand.u32 %s229, 1
        %s542 = smul.addr %s541, 16
        %s543 = scalar_lea.vmem [#allocation8], %s542
        %p544 = pneg %p242
        %p545 = pneg %p239
        %p546 = pneg %p263
        %p547 = pneg %p260
        %p548 = pneg %p284
        %p549 = pneg %p281
        %p550 = pneg %p310
        %p551 = pneg %p307
        %p552 = scmp.lt.s32.totalorder %s33, 1
        %s553 = scalar_select %p552, %s33, 1
        %s554 = smul.addr %s553, 2
        %s555 = smul.addr %s554, 8
        %s556 = scalar_lea.vmem %s11, %s555
        %p557 = pneg %p331
        %p558 = pneg %p328
        %p559 = scmp.lt.s32.totalorder %s33, 1
        %s560 = scalar_select %p559, %s33, 1
        %s561 = smul.addr %s560, 32
        %s562 = smul.addr %s561, 4
        %s563 = scalar_lea.vmem %s5, %s562
        %p564 = scmp.lt.s32.totalorder %s33, 1
        %s565 = scalar_select %p564, %s33, 1
        %s566 = smul.addr %s565, 2
        %s567 = smul.addr %s566, 8
        %s568 = scalar_lea.vmem %s11, %s567
        %p570 = scmp.eq.s32.totalorder %s33, 0
        // Predicated region
        $region81: #{_forward_impl.1} parent=63 // pred_check
          %p571 = pneg %p570
        $region82: #{_forward_impl.1} parent=63 // pred_check_branch
          %573 = sbr.rel (%p571) target = $region84
        $region83: #{_forward_impl.1} parent=63 // pred_region
          %v574 = vld [vmem:[%s0] sm:$0xff]
          %v575 = vld [vmem:[%s0 + $0x8] sm:$0xff]
          %576 = vst [vmem:[#allocation2] sm:$0xff] %v574
          %577 = vst [vmem:[#allocation2 + $0x8] sm:$0xff] %v575
        $region84: #{_forward_impl.1} parent=63 // pred_fallthru
          _
        %v578 = vld [vmem:[#allocation2] sm:$0xff]
        %v579 = vld [vmem:[#allocation2 + $0x8] sm:$0xff]
        %580 = vst [vmem:[%s568] sm:$0xff] %v578
        %581 = vst [vmem:[%s568 + $0x8] sm:$0xff] %v579
        %v582 = vlaneseq
        %v583 = vand.u32 %v582, 127
        %vm584 = vcmp.ge.s32.totalorder %v583, 0
        %vm585 = vcmp.lt.s32.totalorder %v583, 16
        %vm586 = vmand %vm584, %vm585
        %v587 = vsel %vm586, 1, 0
        %v588 = vcvt.s32.f32 %v587
        %vm589 = vcmp.ge.s32.totalorder %v583, 16
        %vm590 = vcmp.lt.s32.totalorder %v583, 32
        %vm591 = vmand %vm589, %vm590
        %v592 = vsel %vm591, 1, 0
        %v593 = vcvt.s32.f32 %v592
        %v594 = vld [vmem:[%s2] sm:$0xff]
        %v595 = vld [vmem:[%s2 + $0x8] sm:$0xff]
        %v596 = vld [vmem:[%s471] sm:$0xff]
        %v597 = vld [vmem:[%s471 + $0x8] sm:$0xf]
        %v598 = vld [vmem:[%s471 + $0xc] sm:$0xff]
        %v599 = vld [vmem:[%s471 + $0x14] sm:$0xf]
        %v600 = vld [vmem:[%s471 + $0x18] sm:$0xff]
        %v601 = vld [vmem:[%s471 + $0x20] sm:$0xf]
        %v602 = vld [vmem:[%s471 + $0x24] sm:$0xff]
        %v603 = vld [vmem:[%s471 + $0x2c] sm:$0xf]
        %v604 = vld [vmem:[%s471 + $0x30] sm:$0xff]
        %v605 = vld [vmem:[%s471 + $0x38] sm:$0xf]
        %v606 = vld [vmem:[%s471 + $0x3c] sm:$0xff]
        %v607 = vld [vmem:[%s471 + $0x44] sm:$0xf]
        %v608 = vld [vmem:[%s471 + $0x48] sm:$0xff]
        %v609 = vld [vmem:[%s471 + $0x50] sm:$0xf]
        %v610 = vld [vmem:[%s471 + $0x54] sm:$0xff]
        %v611 = vld [vmem:[%s471 + $0x5c] sm:$0xf]
        %v612 = vld [vmem:[%s471 + $0x60] sm:$0xff]
        %v613 = vld [vmem:[%s471 + $0x68] sm:$0xf]
        %v614 = vld [vmem:[%s471 + $0x6c] sm:$0xff]
        %v615 = vld [vmem:[%s471 + $0x74] sm:$0xf]
        %v616 = vld [vmem:[%s471 + $0x78] sm:$0xff]
        %v617 = vld [vmem:[%s471 + $0x80] sm:$0xf]
        %v618 = vld [vmem:[%s471 + $0x84] sm:$0xff]
        %v619 = vld [vmem:[%s471 + $0x8c] sm:$0xf]
        %v620 = vld [vmem:[%s471 + $0x90] sm:$0xff]
        %v621 = vld [vmem:[%s471 + $0x98] sm:$0xf]
        %v622 = vld [vmem:[%s471 + $0x9c] sm:$0xff]
        %v623 = vld [vmem:[%s471 + $0xa4] sm:$0xf]
        %v624 = vld [vmem:[%s471 + $0xa8] sm:$0xff]
        %v625 = vld [vmem:[%s471 + $0xb0] sm:$0xf]
        %v626 = vld [vmem:[%s471 + $0xb4] sm:$0xff]
        %v627 = vld [vmem:[%s471 + $0xbc] sm:$0xf]
        %v628 = vld [vmem:[%s563] sm:$0xf]
        %v629 = vld [vmem:[%s563 + $0x4] sm:$0xf]
        %v630 = vld [vmem:[%s563 + $0x8] sm:$0xf]
        %v631 = vld [vmem:[%s563 + $0xc] sm:$0xf]
        %v632 = vld [vmem:[%s563 + $0x10] sm:$0xf]
        %v633 = vld [vmem:[%s563 + $0x14] sm:$0xf]
        %v634 = vld [vmem:[%s563 + $0x18] sm:$0xf]
        %v635 = vld [vmem:[%s563 + $0x1c] sm:$0xf]
        %v636 = vld [vmem:[%s563 + $0x20] sm:$0xf]
        %v637 = vld [vmem:[%s563 + $0x24] sm:$0xf]
        %v638 = vld [vmem:[%s563 + $0x28] sm:$0xf]
        %v639 = vld [vmem:[%s563 + $0x2c] sm:$0xf]
        %v640 = vld [vmem:[%s563 + $0x30] sm:$0xf]
        %v641 = vld [vmem:[%s563 + $0x34] sm:$0xf]
        %v642 = vld [vmem:[%s563 + $0x38] sm:$0xf]
        %v643 = vld [vmem:[%s563 + $0x3c] sm:$0xf]
        %v644 = vld [vmem:[%s498] sm:$0x1]
        %v645 = vld [vmem:[%s498 + $0x1] sm:$0x1]
        %v646 = vld [vmem:[%s498 + $0x2] sm:$0x1]
        %v647 = vld [vmem:[%s498 + $0x6] sm:$0x1]
        %v648 = vpack.c.bf16 %v579, %v578
        %v681 = vunpack.c.l.b16 %v596
        %v682 = vunpack.c.h.b16 %v596
        %v683 = vunpack.c.l.b16 %v597
        %v684 = vunpack.c.l.b16 %v598
        %v685 = vunpack.c.h.b16 %v598
        %v686 = vunpack.c.l.b16 %v599
        %v687 = vunpack.c.l.b16 %v600
        %v688 = vunpack.c.h.b16 %v600
        %v689 = vunpack.c.l.b16 %v601
        %v690 = vunpack.c.l.b16 %v602
        %v691 = vunpack.c.h.b16 %v602
        %v692 = vunpack.c.l.b16 %v603
        %v693 = vunpack.c.l.b16 %v604
        %v694 = vunpack.c.h.b16 %v604
        %v695 = vunpack.c.l.b16 %v605
        %v696 = vunpack.c.l.b16 %v606
        %v697 = vunpack.c.h.b16 %v606
        %v698 = vunpack.c.l.b16 %v607
        %v699 = vunpack.c.l.b16 %v608
        %v700 = vunpack.c.h.b16 %v608
        %v701 = vunpack.c.l.b16 %v609
        %v702 = vunpack.c.l.b16 %v610
        %v703 = vunpack.c.h.b16 %v610
        %v704 = vunpack.c.l.b16 %v611
        %v705 = vunpack.c.l.b16 %v612
        %v706 = vunpack.c.h.b16 %v612
        %v707 = vunpack.c.l.b16 %v613
        %v708 = vunpack.c.l.b16 %v614
        %v709 = vunpack.c.h.b16 %v614
        %v710 = vunpack.c.l.b16 %v615
        %v711 = vunpack.c.l.b16 %v616
        %v712 = vunpack.c.h.b16 %v616
        %v713 = vunpack.c.l.b16 %v617
        %v714 = vunpack.c.l.b16 %v618
        %v715 = vunpack.c.h.b16 %v618
        %v716 = vunpack.c.l.b16 %v619
        %v717 = vunpack.c.l.b16 %v620
        %v718 = vunpack.c.h.b16 %v620
        %v719 = vunpack.c.l.b16 %v621
        %v720 = vunpack.c.l.b16 %v622
        %v721 = vunpack.c.h.b16 %v622
        %v722 = vunpack.c.l.b16 %v623
        %v723 = vunpack.c.l.b16 %v624
        %v724 = vunpack.c.h.b16 %v624
        %v725 = vunpack.c.l.b16 %v625
        %v726 = vunpack.c.l.b16 %v626
        %v727 = vunpack.c.h.b16 %v626
        %v728 = vunpack.c.l.b16 %v627
        %v729 = vpack.c.b16 %v684, %v681
        %v730 = vpack.c.b16 %v685, %v682
        %v731 = vpack.c.b16 %v686, %v683
        %v732 = vpack.c.b16 %v690, %v687
        %v733 = vpack.c.b16 %v691, %v688
        %v734 = vpack.c.b16 %v692, %v689
        %v735 = vpack.c.b16 %v696, %v693
        %v736 = vpack.c.b16 %v697, %v694
        %v737 = vpack.c.b16 %v698, %v695
        %v738 = vpack.c.b16 %v702, %v699
        %v739 = vpack.c.b16 %v703, %v700
        %v740 = vpack.c.b16 %v704, %v701
        %v741 = vpack.c.b16 %v708, %v705
        %v742 = vpack.c.b16 %v709, %v706
        %v743 = vpack.c.b16 %v710, %v707
        %v744 = vpack.c.b16 %v714, %v711
        %v745 = vpack.c.b16 %v715, %v712
        %v746 = vpack.c.b16 %v716, %v713
        %v747 = vpack.c.b16 %v720, %v717
        %v748 = vpack.c.b16 %v721, %v718
        %v749 = vpack.c.b16 %v722, %v719
        %v750 = vpack.c.b16 %v726, %v723
        %v751 = vpack.c.b16 %v727, %v724
        %v752 = vpack.c.b16 %v728, %v725
        %777 = vmatprep.subr.bf16.mxu0 %v751
        %778 = vmatpush1.bf16.msra.mxu0 %v750
        %779 = vmatprep.subr.bf16.mxu0 %v748
        %780 = vmatpush1.bf16.msra.mxu0 %v747
        %781 = vmatprep.subr.bf16.mxu0 %v745
        %782 = vmatpush1.bf16.msra.mxu0 %v744
        %783 = vmatprep.subr.bf16.mxu0 %v742
        %784 = vmatpush1.bf16.msra.mxu0 %v741
        %785 = vmatprep.subr.bf16.mxu0 %v739
        %786 = vmatpush1.bf16.msra.mxu0 %v738
        %787 = vmatprep.subr.bf16.mxu0 %v736
        %788 = vmatpush1.bf16.msra.mxu0 %v735
        %789 = vmatprep.subr.bf16.mxu0 %v733
        %790 = vmatpush1.bf16.msra.mxu0 %v732
        %791 = vmatprep.subr.bf16.mxu0 %v730
        %792 = vmatpush1.bf16.msra.mxu0 %v729
        %793 = vmatprep.subr.bf16.mxu0 0
        %794 = vmatpush2.bf16.msra.mxu0 0
        %795 = vmatprep.subr.bf16.mxu0 0
        %796 = vmatpush2.bf16.msra.mxu0 0
        %797 = vmatprep.subr.bf16.mxu0 0
        %798 = vmatpush2.bf16.msra.mxu0 0
        %799 = vmatprep.subr.bf16.mxu0 0
        %800 = vmatpush2.bf16.msra.mxu0 0
        %801 = vmatprep.subr.bf16.mxu0 0
        %802 = vmatpush2.bf16.msra.mxu0 0
        %803 = vmatprep.subr.bf16.mxu0 0
        %804 = vmatpush2.bf16.msra.mxu0 0
        %805 = vmatprep.subr.bf16.mxu0 0
        %806 = vmatpush2.bf16.msra.mxu0 0
        %807 = vmatprep.subr.bf16.mxu0 0
        %808 = vmatpush2.bf16.msra.mxu0 0
        %809 = vmatprep.mubr.bf16.mxu0 0
        %810 = vmatmul.mubr.bf16.gmra.mxu0 %v648
        %v811 = vpop.f32.mrf.mxu0
        %v812 = vadd.f32 0.0, %v811
        %v813 = vpop.f32.mrf.mxu0
        %v814 = vadd.f32 0.0, %v813
        %v815 = vpop.f32.mrf.mxu0
        %v816 = vadd.f32 0.0, %v815
        %v817 = vpop.f32.mrf.mxu0
        %v818 = vadd.f32 0.0, %v817
        %819 = vdwg.mxu0
        %820 = vmatprep.subr.bf16.mxu0 0
        %821 = vmatpush1.bf16.msra.mxu0 %v752
        %822 = vmatprep.subr.bf16.mxu0 0
        %823 = vmatpush1.bf16.msra.mxu0 %v749
        %824 = vmatprep.subr.bf16.mxu0 0
        %825 = vmatpush1.bf16.msra.mxu0 %v746
        %826 = vmatprep.subr.bf16.mxu0 0
        %827 = vmatpush1.bf16.msra.mxu0 %v743
        %828 = vmatprep.subr.bf16.mxu0 0
        %829 = vmatpush1.bf16.msra.mxu0 %v740
        %830 = vmatprep.subr.bf16.mxu0 0
        %831 = vmatpush1.bf16.msra.mxu0 %v737
        %832 = vmatprep.subr.bf16.mxu0 0
        %833 = vmatpush1.bf16.msra.mxu0 %v734
        %834 = vmatprep.subr.bf16.mxu0 0
        %835 = vmatpush1.bf16.msra.mxu0 %v731
        %836 = vmatprep.subr.bf16.mxu0 0
        %837 = vmatpush2.bf16.msra.mxu0 0
        %838 = vmatprep.subr.bf16.mxu0 0
        %839 = vmatpush2.bf16.msra.mxu0 0
        %840 = vmatprep.subr.bf16.mxu0 0
        %841 = vmatpush2.bf16.msra.mxu0 0
        %842 = vmatprep.subr.bf16.mxu0 0
        %843 = vmatpush2.bf16.msra.mxu0 0
        %844 = vmatprep.subr.bf16.mxu0 0
        %845 = vmatpush2.bf16.msra.mxu0 0
        %846 = vmatprep.subr.bf16.mxu0 0
        %847 = vmatpush2.bf16.msra.mxu0 0
        %848 = vmatprep.subr.bf16.mxu0 0
        %849 = vmatpush2.bf16.msra.mxu0 0
        %850 = vmatprep.subr.bf16.mxu0 0
        %851 = vmatpush2.bf16.msra.mxu0 0
        %852 = vmatprep.mubr.bf16.mxu0 0
        %853 = vmatmul.mubr.bf16.gmra.mxu0 %v648
        %v854 = vpop.f32.mrf.mxu0
        %v855 = vadd.f32 0.0, %v854
        %v856 = vpop.f32.mrf.mxu0
        %v857 = vpop.f32.mrf.mxu0
        %v858 = vadd.f32 0.0, %v857
        %v859 = vpop.f32.mrf.mxu0
        %860 = vdwg.mxu0
        %v861 = vlaneseq
        %v862 = vshrl.u32 %v861, 7
        %v863 = vsub.s32 0, %v862
        %v864 = vrot.slane %v644, %v863
        %v865 = vadd.f32 %v812, %v864
        %v866 = vadd.f32 %v816, %v864
        %v867 = vlaneseq
        %v868 = vshrl.u32 %v867, 7
        %v869 = vsub.s32 0, %v868
        %v870 = vrot.slane %v645, %v869
        %v871 = vadd.f32 %v814, %v870
        %v872 = vadd.f32 %v818, %v870
        %v873 = vlaneseq
        %v874 = vshrl.u32 %v873, 7
        %v875 = vsub.s32 0, %v874
        %v876 = vrot.slane %v646, %v875
        %v877 = vadd.f32 %v855, %v876
        %v878 = vadd.f32 %v858, %v876
        %v879 = vmul.f32 %v865, %v588
        %v880 = vmul.f32 %v866, %v588
        %v881 = vpack.c.bf16 %v880, %v879
        %v882 = vpack.c.bf16 %v872, %v871
        %883 = vmatprep.subr.bf16.mxu0 0
        %884 = vmatpush1.bf16.xpose.msra.mxu0 0
        %885 = vmatprep.subr.bf16.mxu0 0
        %886 = vmatpush1.bf16.xpose.msra.mxu0 0
        %887 = vmatprep.subr.bf16.mxu0 0
        %888 = vmatpush1.bf16.xpose.msra.mxu0 0
        %889 = vmatprep.subr.bf16.mxu0 0
        %890 = vmatpush1.bf16.xpose.msra.mxu0 0
        %891 = vmatprep.subr.bf16.mxu0 0
        %892 = vmatpush1.bf16.xpose.msra.mxu0 0
        %893 = vmatprep.subr.bf16.mxu0 0
        %894 = vmatpush1.bf16.xpose.msra.mxu0 0
        %895 = vmatprep.subr.bf16.mxu0 0
        %896 = vmatpush1.bf16.xpose.msra.mxu0 0
        %897 = vmatprep.subr.bf16.mxu0 0
        %898 = vmatpush1.bf16.xpose.msra.mxu0 %v882
        %899 = vmatprep.subr.bf16.mxu0 0
        %900 = vmatpush2.bf16.xpose.msra.mxu0 0
        %901 = vmatprep.subr.bf16.mxu0 0
        %902 = vmatpush2.bf16.xpose.msra.mxu0 0
        %903 = vmatprep.subr.bf16.mxu0 0
        %904 = vmatpush2.bf16.xpose.msra.mxu0 0
        %905 = vmatprep.subr.bf16.mxu0 0
        %906 = vmatpush2.bf16.xpose.msra.mxu0 0
        %907 = vmatprep.subr.bf16.mxu0 0
        %908 = vmatpush2.bf16.xpose.msra.mxu0 0
        %909 = vmatprep.subr.bf16.mxu0 0
        %910 = vmatpush2.bf16.xpose.msra.mxu0 0
        %911 = vmatprep.subr.bf16.mxu0 0
        %912 = vmatpush2.bf16.xpose.msra.mxu0 0
        %913 = vmatprep.subr.bf16.mxu0 0
        %914 = vmatpush2.bf16.xpose.msra.mxu0 0
        %915 = vmatprep.mubr.bf16.mxu0 0
        %916 = vmatmul.mubr.bf16.gmra.mxu0 %v881
        %v917 = vpop.f32.mrf.mxu0
        %v918 = vadd.f32 %v594, %v917
        %v919 = vpop.f32.mrf.mxu0
        %v920 = vpop.f32.mrf.mxu0
        %v921 = vadd.f32 %v595, %v920
        %v922 = vpop.f32.mrf.mxu0
        %923 = vdwg.mxu0
        %vm924 = vcmask 130048
        %v925 = vsel %vm924, %v918, -inf
        %926 = vmax.xlane.f32.xlu0 %v925
        %v927 = vpop.xlane.xlu0 %926
        %v928 = vsel %vm924, %v921, -inf
        %929 = vmax.xlane.f32.xlu0 %v928
        %v930 = vpop.xlane.xlu0 %929
        %v931 = vsub.f32 %v918, %v927
        %v932 = vsub.f32 %v921, %v930
        %v933 = vmul.f32 %v931, 1.442695
        %v934 = vpow.pop %v933
        %v935 = vmul.f32 %v932, 1.442695
        %v936 = vpow.pop %v935
        %v937 = vsel %vm924, %v934, 0.0
        %938 = vadd.xlane.f32.xlu0 %v937
        %v939 = vpop.xlane.xlu0 %938
        %v940 = vsel %vm924, %v936, 0.0
        %941 = vadd.xlane.f32.xlu0 %v940
        %v942 = vpop.xlane.xlu0 %941
        %v943 = vrcp.pop %v939
        %v944 = vrcp.pop %v942
        %v945 = vmul.f32 %v934, %v943
        %v946 = vmul.f32 %v936, %v944
        %v947 = vpack.c.bf16 %v946, %v945
        %v948 = vpack.c.bf16 %v878, %v877
        %v950 = vsel %vm924, %v947, 0
        %952 = vmatprep.subr.bf16.mxu0 0
        %953 = vmatpush1.bf16.msra.mxu0 0
        %954 = vmatprep.subr.bf16.mxu0 0
        %955 = vmatpush1.bf16.msra.mxu0 0
        %956 = vmatprep.subr.bf16.mxu0 0
        %957 = vmatpush1.bf16.msra.mxu0 0
        %958 = vmatprep.subr.bf16.mxu0 0
        %959 = vmatpush1.bf16.msra.mxu0 0
        %960 = vmatprep.subr.bf16.mxu0 0
        %961 = vmatpush1.bf16.msra.mxu0 0
        %962 = vmatprep.subr.bf16.mxu0 0
        %963 = vmatpush1.bf16.msra.mxu0 0
        %964 = vmatprep.subr.bf16.mxu0 0
        %965 = vmatpush1.bf16.msra.mxu0 0
        %966 = vmatprep.subr.bf16.mxu0 0
        %967 = vmatpush1.bf16.msra.mxu0 %v948
        %968 = vmatprep.subr.bf16.mxu0 0
        %969 = vmatpush2.bf16.msra.mxu0 0
        %970 = vmatprep.subr.bf16.mxu0 0
        %971 = vmatpush2.bf16.msra.mxu0 0
        %972 = vmatprep.subr.bf16.mxu0 0
        %973 = vmatpush2.bf16.msra.mxu0 0
        %974 = vmatprep.subr.bf16.mxu0 0
        %975 = vmatpush2.bf16.msra.mxu0 0
        %976 = vmatprep.subr.bf16.mxu0 0
        %977 = vmatpush2.bf16.msra.mxu0 0
        %978 = vmatprep.subr.bf16.mxu0 0
        %979 = vmatpush2.bf16.msra.mxu0 0
        %980 = vmatprep.subr.bf16.mxu0 0
        %981 = vmatpush2.bf16.msra.mxu0 0
        %982 = vmatprep.subr.bf16.mxu0 0
        %983 = vmatpush2.bf16.msra.mxu0 0
        %984 = vmatprep.mubr.bf16.mxu0 0
        %985 = vmatmul.mubr.bf16.gmra.mxu0 %v950
        %v986 = vpop.f32.mrf.mxu0
        %v987 = vadd.f32 0.0, %v986
        %v988 = vpop.f32.mrf.mxu0
        %v989 = vpop.f32.mrf.mxu0
        %v990 = vadd.f32 0.0, %v989
        %v991 = vpop.f32.mrf.mxu0
        %992 = vdwg.mxu0
        %v993 = vmul.f32 %v987, %v588
        %v994 = vmul.f32 %v990, %v588
        %v995 = vadd.f32 %v993, 0.0
        %v996 = vadd.f32 %v994, 0.0
        %v997 = vmul.f32 %v865, %v593
        %v998 = vmul.f32 %v866, %v593
        %v999 = vpack.c.bf16 %v998, %v997
        %1000 = vmatprep.subr.bf16.mxu0 0
        %1001 = vmatpush1.bf16.xpose.msra.mxu0 0
        %1002 = vmatprep.subr.bf16.mxu0 0
        %1003 = vmatpush1.bf16.xpose.msra.mxu0 0
        %1004 = vmatprep.subr.bf16.mxu0 0
        %1005 = vmatpush1.bf16.xpose.msra.mxu0 0
        %1006 = vmatprep.subr.bf16.mxu0 0
        %1007 = vmatpush1.bf16.xpose.msra.mxu0 0
        %1008 = vmatprep.subr.bf16.mxu0 0
        %1009 = vmatpush1.bf16.xpose.msra.mxu0 0
        %1010 = vmatprep.subr.bf16.mxu0 0
        %1011 = vmatpush1.bf16.xpose.msra.mxu0 0
        %1012 = vmatprep.subr.bf16.mxu0 0
        %1013 = vmatpush1.bf16.xpose.msra.mxu0 0
        %1014 = vmatprep.subr.bf16.mxu0 0
        %1015 = vmatpush1.bf16.xpose.msra.mxu0 %v882
        %1016 = vmatprep.subr.bf16.mxu0 0
        %1017 = vmatpush2.bf16.xpose.msra.mxu0 0
        %1018 = vmatprep.subr.bf16.mxu0 0
        %1019 = vmatpush2.bf16.xpose.msra.mxu0 0
        %1020 = vmatprep.subr.bf16.mxu0 0
        %1021 = vmatpush2.bf16.xpose.msra.mxu0 0
        %1022 = vmatprep.subr.bf16.mxu0 0
        %1023 = vmatpush2.bf16.xpose.msra.mxu0 0
        %1024 = vmatprep.subr.bf16.mxu0 0
        %1025 = vmatpush2.bf16.xpose.msra.mxu0 0
        %1026 = vmatprep.subr.bf16.mxu0 0
        %1027 = vmatpush2.bf16.xpose.msra.mxu0 0
        %1028 = vmatprep.subr.bf16.mxu0 0
        %1029 = vmatpush2.bf16.xpose.msra.mxu0 0
        %1030 = vmatprep.subr.bf16.mxu0 0
        %1031 = vmatpush2.bf16.xpose.msra.mxu0 0
        %1032 = vmatprep.mubr.bf16.mxu0 0
        %1033 = vmatmul.mubr.bf16.gmra.mxu0 %v999
        %v1034 = vpop.f32.mrf.mxu0
        %v1035 = vadd.f32 %v594, %v1034
        %v1036 = vpop.f32.mrf.mxu0
        %v1037 = vpop.f32.mrf.mxu0
        %v1038 = vadd.f32 %v595, %v1037
        %v1039 = vpop.f32.mrf.mxu0
        %1040 = vdwg.mxu0
        %v1041 = vsel %vm924, %v1035, -inf
        %1042 = vmax.xlane.f32.xlu0 %v1041
        %v1043 = vpop.xlane.xlu0 %1042
        %v1044 = vsel %vm924, %v1038, -inf
        %1045 = vmax.xlane.f32.xlu0 %v1044
        %v1046 = vpop.xlane.xlu0 %1045
        %v1047 = vsub.f32 %v1035, %v1043
        %v1048 = vsub.f32 %v1038, %v1046
        %v1049 = vmul.f32 %v1047, 1.442695
        %v1050 = vpow.pop %v1049
        %v1051 = vmul.f32 %v1048, 1.442695
        %v1052 = vpow.pop %v1051
        %v1053 = vsel %vm924, %v1050, 0.0
        %1054 = vadd.xlane.f32.xlu0 %v1053
        %v1055 = vpop.xlane.xlu0 %1054
        %v1056 = vsel %vm924, %v1052, 0.0
        %1057 = vadd.xlane.f32.xlu0 %v1056
        %v1058 = vpop.xlane.xlu0 %1057
        %v1059 = vrcp.pop %v1055
        %v1060 = vrcp.pop %v1058
        %v1061 = vmul.f32 %v1050, %v1059
        %v1062 = vmul.f32 %v1052, %v1060
        %v1063 = vpack.c.bf16 %v1062, %v1061
        %v1065 = vsel %vm924, %v1063, 0
        %1067 = vmatprep.subr.bf16.mxu0 0
        %1068 = vmatpush1.bf16.msra.mxu0 0
        %1069 = vmatprep.subr.bf16.mxu0 0
        %1070 = vmatpush1.bf16.msra.mxu0 0
        %1071 = vmatprep.subr.bf16.mxu0 0
        %1072 = vmatpush1.bf16.msra.mxu0 0
        %1073 = vmatprep.subr.bf16.mxu0 0
        %1074 = vmatpush1.bf16.msra.mxu0 0
        %1075 = vmatprep.subr.bf16.mxu0 0
        %1076 = vmatpush1.bf16.msra.mxu0 0
        %1077 = vmatprep.subr.bf16.mxu0 0
        %1078 = vmatpush1.bf16.msra.mxu0 0
        %1079 = vmatprep.subr.bf16.mxu0 0
        %1080 = vmatpush1.bf16.msra.mxu0 0
        %1081 = vmatprep.subr.bf16.mxu0 0
        %1082 = vmatpush1.bf16.msra.mxu0 %v948
        %1083 = vmatprep.subr.bf16.mxu0 0
        %1084 = vmatpush2.bf16.msra.mxu0 0
        %1085 = vmatprep.subr.bf16.mxu0 0
        %1086 = vmatpush2.bf16.msra.mxu0 0
        %1087 = vmatprep.subr.bf16.mxu0 0
        %1088 = vmatpush2.bf16.msra.mxu0 0
        %1089 = vmatprep.subr.bf16.mxu0 0
        %1090 = vmatpush2.bf16.msra.mxu0 0
        %1091 = vmatprep.subr.bf16.mxu0 0
        %1092 = vmatpush2.bf16.msra.mxu0 0
        %1093 = vmatprep.subr.bf16.mxu0 0
        %1094 = vmatpush2.bf16.msra.mxu0 0
        %1095 = vmatprep.subr.bf16.mxu0 0
        %1096 = vmatpush2.bf16.msra.mxu0 0
        %1097 = vmatprep.subr.bf16.mxu0 0
        %1098 = vmatpush2.bf16.msra.mxu0 0
        %1099 = vmatprep.mubr.bf16.mxu0 0
        %1100 = vmatmul.mubr.bf16.gmra.mxu0 %v1065
        %v1101 = vpop.f32.mrf.mxu0
        %v1102 = vadd.f32 0.0, %v1101
        %v1103 = vpop.f32.mrf.mxu0
        %v1104 = vpop.f32.mrf.mxu0
        %v1105 = vadd.f32 0.0, %v1104
        %v1106 = vpop.f32.mrf.mxu0
        %1107 = vdwg.mxu0
        %v1108 = vmul.f32 %v1102, %v593
        %v1109 = vmul.f32 %v1105, %v593
        %v1110 = vadd.f32 %v995, %v1108
        %v1111 = vadd.f32 %v996, %v1109
        %v1112 = vpack.c.bf16 %v1111, %v1110
        %v1113 = vlaneseq
        %v1114 = vshrl.u32 %v1113, 7
        %v1115 = vsub.s32 0, %v1114
        %v1116 = vrot.slane %v647, %v1115
        %v1133 = vunpack.c.l.b16 %v628
        %v1134 = vunpack.c.l.b16 %v629
        %v1135 = vunpack.c.l.b16 %v630
        %v1136 = vunpack.c.l.b16 %v631
        %v1137 = vunpack.c.l.b16 %v632
        %v1138 = vunpack.c.l.b16 %v633
        %v1139 = vunpack.c.l.b16 %v634
        %v1140 = vunpack.c.l.b16 %v635
        %v1141 = vunpack.c.l.b16 %v636
        %v1142 = vunpack.c.l.b16 %v637
        %v1143 = vunpack.c.l.b16 %v638
        %v1144 = vunpack.c.l.b16 %v639
        %v1145 = vunpack.c.l.b16 %v640
        %v1146 = vunpack.c.l.b16 %v641
        %v1147 = vunpack.c.l.b16 %v642
        %v1148 = vunpack.c.l.b16 %v643
        %v1149 = vpack.c.b16 %v1134, %v1133
        %v1150 = vpack.c.b16 %v1136, %v1135
        %v1151 = vpack.c.b16 %v1138, %v1137
        %v1152 = vpack.c.b16 %v1140, %v1139
        %v1153 = vpack.c.b16 %v1142, %v1141
        %v1154 = vpack.c.b16 %v1144, %v1143
        %v1155 = vpack.c.b16 %v1146, %v1145
        %v1156 = vpack.c.b16 %v1148, %v1147
        %1165 = vmatprep.subr.bf16.mxu0 0
        %1166 = vmatpush1.bf16.msra.mxu0 %v1156
        %1167 = vmatprep.subr.bf16.mxu0 0
        %1168 = vmatpush1.bf16.msra.mxu0 %v1155
        %1169 = vmatprep.subr.bf16.mxu0 0
        %1170 = vmatpush1.bf16.msra.mxu0 %v1154
        %1171 = vmatprep.subr.bf16.mxu0 0
        %1172 = vmatpush1.bf16.msra.mxu0 %v1153
        %1173 = vmatprep.subr.bf16.mxu0 0
        %1174 = vmatpush1.bf16.msra.mxu0 %v1152
        %1175 = vmatprep.subr.bf16.mxu0 0
        %1176 = vmatpush1.bf16.msra.mxu0 %v1151
        %1177 = vmatprep.subr.bf16.mxu0 0
        %1178 = vmatpush1.bf16.msra.mxu0 %v1150
        %1179 = vmatprep.subr.bf16.mxu0 0
        %1180 = vmatpush1.bf16.msra.mxu0 %v1149
        %1181 = vmatprep.subr.bf16.mxu0 0
        %1182 = vmatpush2.bf16.msra.mxu0 0
        %1183 = vmatprep.subr.bf16.mxu0 0
        %1184 = vmatpush2.bf16.msra.mxu0 0
        %1185 = vmatprep.subr.bf16.mxu0 0
        %1186 = vmatpush2.bf16.msra.mxu0 0
        %1187 = vmatprep.subr.bf16.mxu0 0
        %1188 = vmatpush2.bf16.msra.mxu0 0
        %1189 = vmatprep.subr.bf16.mxu0 0
        %1190 = vmatpush2.bf16.msra.mxu0 0
        %1191 = vmatprep.subr.bf16.mxu0 0
        %1192 = vmatpush2.bf16.msra.mxu0 0
        %1193 = vmatprep.subr.bf16.mxu0 0
        %1194 = vmatpush2.bf16.msra.mxu0 0
        %1195 = vmatprep.subr.bf16.mxu0 0
        %1196 = vmatpush2.bf16.msra.mxu0 0
        %1197 = vmatprep.mubr.bf16.mxu0 0
        %1198 = vmatmul.mubr.bf16.gmra.mxu0 %v1112
        %v1199 = vpop.f32.mrf.mxu0
        %v1200 = vadd.f32 %v1116, %v1199
        %v1201 = vpop.f32.mrf.mxu0
        %v1202 = vpop.f32.mrf.mxu0
        %v1203 = vadd.f32 %v1116, %v1202
        %v1204 = vpop.f32.mrf.mxu0
        %1205 = vdwg.mxu0
        %v1206 = vadd.f32 %v578, %v1200
        %v1207 = vadd.f32 %v579, %v1203
        %v1208 = vld [vmem:[%s498 + $0x8] sm:$0x1]
        %v1209 = vld [vmem:[%s498 + $0x9] sm:$0x1]
        %1210 = vadd.xlane.f32.xlu0 %v1206
        %v1211 = vpop.xlane.xlu0 %1210
        %1212 = vadd.xlane.f32.xlu0 %v1207
        %v1213 = vpop.xlane.xlu0 %1212
        %v1214 = vmul.f32 %v1211, 0.03125
        %v1215 = vmul.f32 %v1213, 0.03125
        %v1216 = vmul.f32 %v1206, %v1206
        %v1217 = vmul.f32 %v1207, %v1207
        %1218 = vadd.xlane.f32.xlu0 %v1216
        %v1219 = vpop.xlane.xlu0 %1218
        %1220 = vadd.xlane.f32.xlu0 %v1217
        %v1221 = vpop.xlane.xlu0 %1220
        %v1222 = vmul.f32 %v1219, 0.03125
        %v1223 = vmul.f32 %v1221, 0.03125
        %v1224 = vmul.f32 %v1214, %v1214
        %v1225 = vmul.f32 %v1215, %v1215
        %v1226 = vsub.f32 %v1222, %v1224
        %v1227 = vsub.f32 %v1223, %v1225
        %v1228 = vsub.f32 %v1206, %v1214
        %v1229 = vsub.f32 %v1207, %v1215
        %v1230 = vadd.f32 %v1226, 1e-05
        %v1231 = vadd.f32 %v1227, 1e-05
        %v1232 = vrsqrt.pop %v1230
        %v1233 = vrsqrt.pop %v1231
        %v1234 = vmul.f32 %v1228, %v1232
        %v1235 = vmul.f32 %v1229, %v1233
        %v1236 = vlaneseq
        %v1237 = vshrl.u32 %v1236, 7
        %v1238 = vsub.s32 0, %v1237
        %v1239 = vrot.slane %v1208, %v1238
        %v1240 = vmul.f32 %v1234, %v1239
        %v1241 = vmul.f32 %v1235, %v1239
        %v1242 = vlaneseq
        %v1243 = vshrl.u32 %v1242, 7
        %v1244 = vsub.s32 0, %v1243
        %v1245 = vrot.slane %v1209, %v1244
        %v1246 = vadd.f32 %v1240, %v1245
        %v1247 = vadd.f32 %v1241, %v1245
        %v1248 = vld [vmem:[%s1] sm:$0xff]
        %v1249 = vld [vmem:[%s1 + $0x8] sm:$0xff]
        %v1250 = vld [vmem:[%s3] sm:$0xff]
        %v1251 = vld [vmem:[%s3 + $0x8] sm:$0xff]
        %s1252 = scalar_lea.vmem %s471, 192 [#allocation3]
        %v1253 = vld [vmem:[%s1252] sm:$0xff]
        %v1254 = vld [vmem:[%s1252 + $0x8] sm:$0xf]
        %v1255 = vld [vmem:[%s1252 + $0xc] sm:$0xff]
        %v1256 = vld [vmem:[%s1252 + $0x14] sm:$0xf]
        %v1257 = vld [vmem:[%s1252 + $0x18] sm:$0xff]
        %v1258 = vld [vmem:[%s1252 + $0x20] sm:$0xf]
        %v1259 = vld [vmem:[%s1252 + $0x24] sm:$0xff]
        %v1260 = vld [vmem:[%s1252 + $0x2c] sm:$0xf]
        %v1261 = vld [vmem:[%s1252 + $0x30] sm:$0xff]
        %v1262 = vld [vmem:[%s1252 + $0x38] sm:$0xf]
        %v1263 = vld [vmem:[%s1252 + $0x3c] sm:$0xff]
        %v1264 = vld [vmem:[%s1252 + $0x44] sm:$0xf]
        %v1265 = vld [vmem:[%s1252 + $0x48] sm:$0xff]
        %v1266 = vld [vmem:[%s1252 + $0x50] sm:$0xf]
        %v1267 = vld [vmem:[%s1252 + $0x54] sm:$0xff]
        %v1268 = vld [vmem:[%s1252 + $0x5c] sm:$0xf]
        %v1269 = vld [vmem:[%s1252 + $0x60] sm:$0xff]
        %v1270 = vld [vmem:[%s1252 + $0x68] sm:$0xf]
        %v1271 = vld [vmem:[%s1252 + $0x6c] sm:$0xff]
        %v1272 = vld [vmem:[%s1252 + $0x74] sm:$0xf]
        %v1273 = vld [vmem:[%s1252 + $0x78] sm:$0xff]
        %v1274 = vld [vmem:[%s1252 + $0x80] sm:$0xf]
        %v1275 = vld [vmem:[%s1252 + $0x84] sm:$0xff]
        %v1276 = vld [vmem:[%s1252 + $0x8c] sm:$0xf]
        %v1277 = vld [vmem:[%s1252 + $0x90] sm:$0xff]
        %v1278 = vld [vmem:[%s1252 + $0x98] sm:$0xf]
        %v1279 = vld [vmem:[%s1252 + $0x9c] sm:$0xff]
        %v1280 = vld [vmem:[%s1252 + $0xa4] sm:$0xf]
        %v1281 = vld [vmem:[%s1252 + $0xa8] sm:$0xff]
        %v1282 = vld [vmem:[%s1252 + $0xb0] sm:$0xf]
        %v1283 = vld [vmem:[%s1252 + $0xb4] sm:$0xff]
        %v1284 = vld [vmem:[%s1252 + $0xbc] sm:$0xf]
        %s1285 = scalar_lea.vmem %s563, 64
        %v1286 = vld [vmem:[%s1285] sm:$0xf]
        %v1287 = vld [vmem:[%s1285 + $0x4] sm:$0xf]
        %v1288 = vld [vmem:[%s1285 + $0x8] sm:$0xf]
        %v1289 = vld [vmem:[%s1285 + $0xc] sm:$0xf]
        %v1290 = vld [vmem:[%s1285 + $0x10] sm:$0xf]
        %v1291 = vld [vmem:[%s1285 + $0x14] sm:$0xf]
        %v1292 = vld [vmem:[%s1285 + $0x18] sm:$0xf]
        %v1293 = vld [vmem:[%s1285 + $0x1c] sm:$0xf]
        %v1294 = vld [vmem:[%s1285 + $0x20] sm:$0xf]
        %v1295 = vld [vmem:[%s1285 + $0x24] sm:$0xf]
        %v1296 = vld [vmem:[%s1285 + $0x28] sm:$0xf]
        %v1297 = vld [vmem:[%s1285 + $0x2c] sm:$0xf]
        %v1298 = vld [vmem:[%s1285 + $0x30] sm:$0xf]
        %v1299 = vld [vmem:[%s1285 + $0x34] sm:$0xf]
        %v1300 = vld [vmem:[%s1285 + $0x38] sm:$0xf]
        %v1301 = vld [vmem:[%s1285 + $0x3c] sm:$0xf]
        %v1302 = vld [vmem:[%s498 + $0x3] sm:$0x1]
        %v1303 = vld [vmem:[%s498 + $0x4] sm:$0x1]
        %v1304 = vld [vmem:[%s498 + $0x5] sm:$0x1]
        %v1305 = vld [vmem:[%s498 + $0x7] sm:$0x1]
        %v1306 = vpack.c.bf16 %v1247, %v1246
        %v1307 = vlaneseq
        %v1308 = vshrl.u32 %v1307, 7
        %v1309 = vsub.s32 0, %v1308
        %v1310 = vrot.slane %v1302, %v1309
        %v1327 = vunpack.c.l.b16 %v1253
        %v1328 = vunpack.c.l.b16 %v1255
        %v1329 = vunpack.c.l.b16 %v1257
        %v1330 = vunpack.c.l.b16 %v1259
        %v1331 = vunpack.c.l.b16 %v1261
        %v1332 = vunpack.c.l.b16 %v1263
        %v1333 = vunpack.c.l.b16 %v1265
        %v1334 = vunpack.c.l.b16 %v1267
        %v1335 = vunpack.c.l.b16 %v1269
        %v1336 = vunpack.c.l.b16 %v1271
        %v1337 = vunpack.c.l.b16 %v1273
        %v1338 = vunpack.c.l.b16 %v1275
        %v1339 = vunpack.c.l.b16 %v1277
        %v1340 = vunpack.c.l.b16 %v1279
        %v1341 = vunpack.c.l.b16 %v1281
        %v1342 = vunpack.c.l.b16 %v1283
        %v1343 = vpack.c.b16 %v1328, %v1327
        %v1344 = vpack.c.b16 %v1330, %v1329
        %v1345 = vpack.c.b16 %v1332, %v1331
        %v1346 = vpack.c.b16 %v1334, %v1333
        %v1347 = vpack.c.b16 %v1336, %v1335
        %v1348 = vpack.c.b16 %v1338, %v1337
        %v1349 = vpack.c.b16 %v1340, %v1339
        %v1350 = vpack.c.b16 %v1342, %v1341
        %1359 = vmatprep.subr.bf16.mxu0 0
        %1360 = vmatpush1.bf16.msra.mxu0 %v1350
        %1361 = vmatprep.subr.bf16.mxu0 0
        %1362 = vmatpush1.bf16.msra.mxu0 %v1349
        %1363 = vmatprep.subr.bf16.mxu0 0
        %1364 = vmatpush1.bf16.msra.mxu0 %v1348
        %1365 = vmatprep.subr.bf16.mxu0 0
        %1366 = vmatpush1.bf16.msra.mxu0 %v1347
        %1367 = vmatprep.subr.bf16.mxu0 0
        %1368 = vmatpush1.bf16.msra.mxu0 %v1346
        %1369 = vmatprep.subr.bf16.mxu0 0
        %1370 = vmatpush1.bf16.msra.mxu0 %v1345
        %1371 = vmatprep.subr.bf16.mxu0 0
        %1372 = vmatpush1.bf16.msra.mxu0 %v1344
        %1373 = vmatprep.subr.bf16.mxu0 0
        %1374 = vmatpush1.bf16.msra.mxu0 %v1343
        %1375 = vmatprep.subr.bf16.mxu0 0
        %1376 = vmatpush2.bf16.msra.mxu0 0
        %1377 = vmatprep.subr.bf16.mxu0 0
        %1378 = vmatpush2.bf16.msra.mxu0 0
        %1379 = vmatprep.subr.bf16.mxu0 0
        %1380 = vmatpush2.bf16.msra.mxu0 0
        %1381 = vmatprep.subr.bf16.mxu0 0
        %1382 = vmatpush2.bf16.msra.mxu0 0
        %1383 = vmatprep.subr.bf16.mxu0 0
        %1384 = vmatpush2.bf16.msra.mxu0 0
        %1385 = vmatprep.subr.bf16.mxu0 0
        %1386 = vmatpush2.bf16.msra.mxu0 0
        %1387 = vmatprep.subr.bf16.mxu0 0
        %1388 = vmatpush2.bf16.msra.mxu0 0
        %1389 = vmatprep.subr.bf16.mxu0 0
        %1390 = vmatpush2.bf16.msra.mxu0 0
        %1391 = vmatprep.mubr.bf16.mxu0 0
        %1392 = vmatmul.mubr.bf16.gmra.mxu0 %v1306
        %v1393 = vpop.f32.mrf.mxu0
        %v1394 = vadd.f32 %v1310, %v1393
        %v1395 = vpop.f32.mrf.mxu0
        %v1396 = vpop.f32.mrf.mxu0
        %v1397 = vadd.f32 %v1310, %v1396
        %v1398 = vpop.f32.mrf.mxu0
        %1399 = vdwg.mxu0
        %v1400 = vpack.c.bf16 %v1249, %v1248
        %v1417 = vunpack.c.h.b16 %v1253
        %v1418 = vunpack.c.l.b16 %v1254
        %v1419 = vunpack.c.h.b16 %v1255
        %v1420 = vunpack.c.l.b16 %v1256
        %v1421 = vunpack.c.h.b16 %v1257
        %v1422 = vunpack.c.l.b16 %v1258
        %v1423 = vunpack.c.h.b16 %v1259
        %v1424 = vunpack.c.l.b16 %v1260
        %v1425 = vunpack.c.h.b16 %v1261
        %v1426 = vunpack.c.l.b16 %v1262
        %v1427 = vunpack.c.h.b16 %v1263
        %v1428 = vunpack.c.l.b16 %v1264
        %v1429 = vunpack.c.h.b16 %v1265
        %v1430 = vunpack.c.l.b16 %v1266
        %v1431 = vunpack.c.h.b16 %v1267
        %v1432 = vunpack.c.l.b16 %v1268
        %v1433 = vunpack.c.h.b16 %v1269
        %v1434 = vunpack.c.l.b16 %v1270
        %v1435 = vunpack.c.h.b16 %v1271
        %v1436 = vunpack.c.l.b16 %v1272
        %v1437 = vunpack.c.h.b16 %v1273
        %v1438 = vunpack.c.l.b16 %v1274
        %v1439 = vunpack.c.h.b16 %v1275
        %v1440 = vunpack.c.l.b16 %v1276
        %v1441 = vunpack.c.h.b16 %v1277
        %v1442 = vunpack.c.l.b16 %v1278
        %v1443 = vunpack.c.h.b16 %v1279
        %v1444 = vunpack.c.l.b16 %v1280
        %v1445 = vunpack.c.h.b16 %v1281
        %v1446 = vunpack.c.l.b16 %v1282
        %v1447 = vunpack.c.h.b16 %v1283
        %v1448 = vunpack.c.l.b16 %v1284
        %v1449 = vpack.c.b16 %v1419, %v1417
        %v1450 = vpack.c.b16 %v1420, %v1418
        %v1451 = vpack.c.b16 %v1423, %v1421
        %v1452 = vpack.c.b16 %v1424, %v1422
        %v1453 = vpack.c.b16 %v1427, %v1425
        %v1454 = vpack.c.b16 %v1428, %v1426
        %v1455 = vpack.c.b16 %v1431, %v1429
        %v1456 = vpack.c.b16 %v1432, %v1430
        %v1457 = vpack.c.b16 %v1435, %v1433
        %v1458 = vpack.c.b16 %v1436, %v1434
        %v1459 = vpack.c.b16 %v1439, %v1437
        %v1460 = vpack.c.b16 %v1440, %v1438
        %v1461 = vpack.c.b16 %v1443, %v1441
        %v1462 = vpack.c.b16 %v1444, %v1442
        %v1463 = vpack.c.b16 %v1447, %v1445
        %v1464 = vpack.c.b16 %v1448, %v1446
        %1481 = vmatprep.subr.bf16.mxu0 %v1464
        %1482 = vmatpush1.bf16.msra.mxu0 %v1463
        %1483 = vmatprep.subr.bf16.mxu0 %v1462
        %1484 = vmatpush1.bf16.msra.mxu0 %v1461
        %1485 = vmatprep.subr.bf16.mxu0 %v1460
        %1486 = vmatpush1.bf16.msra.mxu0 %v1459
        %1487 = vmatprep.subr.bf16.mxu0 %v1458
        %1488 = vmatpush1.bf16.msra.mxu0 %v1457
        %1489 = vmatprep.subr.bf16.mxu0 %v1456
        %1490 = vmatpush1.bf16.msra.mxu0 %v1455
        %1491 = vmatprep.subr.bf16.mxu0 %v1454
        %1492 = vmatpush1.bf16.msra.mxu0 %v1453
        %1493 = vmatprep.subr.bf16.mxu0 %v1452
        %1494 = vmatpush1.bf16.msra.mxu0 %v1451
        %1495 = vmatprep.subr.bf16.mxu0 %v1450
        %1496 = vmatpush1.bf16.msra.mxu0 %v1449
        %1497 = vmatprep.subr.bf16.mxu0 0
        %1498 = vmatpush2.bf16.msra.mxu0 0
        %1499 = vmatprep.subr.bf16.mxu0 0
        %1500 = vmatpush2.bf16.msra.mxu0 0
        %1501 = vmatprep.subr.bf16.mxu0 0
        %1502 = vmatpush2.bf16.msra.mxu0 0
        %1503 = vmatprep.subr.bf16.mxu0 0
        %1504 = vmatpush2.bf16.msra.mxu0 0
        %1505 = vmatprep.subr.bf16.mxu0 0
        %1506 = vmatpush2.bf16.msra.mxu0 0
        %1507 = vmatprep.subr.bf16.mxu0 0
        %1508 = vmatpush2.bf16.msra.mxu0 0
        %1509 = vmatprep.subr.bf16.mxu0 0
        %1510 = vmatpush2.bf16.msra.mxu0 0
        %1511 = vmatprep.subr.bf16.mxu0 0
        %1512 = vmatpush2.bf16.msra.mxu0 0
        %1513 = vmatprep.mubr.bf16.mxu0 0
        %1514 = vmatmul.mubr.bf16.gmra.mxu0 %v1400
        %v1515 = vpop.f32.mrf.mxu0
        %v1516 = vadd.f32 0.0, %v1515
        %v1517 = vpop.f32.mrf.mxu0
        %v1518 = vadd.f32 0.0, %v1517
        %v1519 = vpop.f32.mrf.mxu0
        %v1520 = vadd.f32 0.0, %v1519
        %v1521 = vpop.f32.mrf.mxu0
        %v1522 = vadd.f32 0.0, %v1521
        %1523 = vdwg.mxu0
        %v1524 = vlaneseq
        %v1525 = vshrl.u32 %v1524, 7
        %v1526 = vsub.s32 0, %v1525
        %v1527 = vrot.slane %v1303, %v1526
        %v1528 = vadd.f32 %v1516, %v1527
        %v1529 = vadd.f32 %v1520, %v1527
        %v1530 = vlaneseq
        %v1531 = vshrl.u32 %v1530, 7
        %v1532 = vsub.s32 0, %v1531
        %v1533 = vrot.slane %v1304, %v1532
        %v1534 = vadd.f32 %v1518, %v1533
        %v1535 = vadd.f32 %v1522, %v1533
        %v1536 = vmul.f32 %v1394, %v588
        %v1537 = vmul.f32 %v1397, %v588
        %v1538 = vpack.c.bf16 %v1537, %v1536
        %v1539 = vpack.c.bf16 %v1529, %v1528
        %1540 = vmatprep.subr.bf16.mxu0 0
        %1541 = vmatpush1.bf16.xpose.msra.mxu0 0
        %1542 = vmatprep.subr.bf16.mxu0 0
        %1543 = vmatpush1.bf16.xpose.msra.mxu0 0
        %1544 = vmatprep.subr.bf16.mxu0 0
        %1545 = vmatpush1.bf16.xpose.msra.mxu0 0
        %1546 = vmatprep.subr.bf16.mxu0 0
        %1547 = vmatpush1.bf16.xpose.msra.mxu0 0
        %1548 = vmatprep.subr.bf16.mxu0 0
        %1549 = vmatpush1.bf16.xpose.msra.mxu0 0
        %1550 = vmatprep.subr.bf16.mxu0 0
        %1551 = vmatpush1.bf16.xpose.msra.mxu0 0
        %1552 = vmatprep.subr.bf16.mxu0 0
        %1553 = vmatpush1.bf16.xpose.msra.mxu0 0
        %1554 = vmatprep.subr.bf16.mxu0 0
        %1555 = vmatpush1.bf16.xpose.msra.mxu0 %v1539
        %1556 = vmatprep.subr.bf16.mxu0 0
        %1557 = vmatpush2.bf16.xpose.msra.mxu0 0
        %1558 = vmatprep.subr.bf16.mxu0 0
        %1559 = vmatpush2.bf16.xpose.msra.mxu0 0
        %1560 = vmatprep.subr.bf16.mxu0 0
        %1561 = vmatpush2.bf16.xpose.msra.mxu0 0
        %1562 = vmatprep.subr.bf16.mxu0 0
        %1563 = vmatpush2.bf16.xpose.msra.mxu0 0
        %1564 = vmatprep.subr.bf16.mxu0 0
        %1565 = vmatpush2.bf16.xpose.msra.mxu0 0
        %1566 = vmatprep.subr.bf16.mxu0 0
        %1567 = vmatpush2.bf16.xpose.msra.mxu0 0
        %1568 = vmatprep.subr.bf16.mxu0 0
        %1569 = vmatpush2.bf16.xpose.msra.mxu0 0
        %1570 = vmatprep.subr.bf16.mxu0 0
        %1571 = vmatpush2.bf16.xpose.msra.mxu0 0
        %1572 = vmatprep.mubr.bf16.mxu0 0
        %1573 = vmatmul.mubr.bf16.gmra.mxu0 %v1538
        %v1574 = vpop.f32.mrf.mxu0
        %v1575 = vadd.f32 %v1250, %v1574
        %v1576 = vpop.f32.mrf.mxu0
        %v1577 = vpop.f32.mrf.mxu0
        %v1578 = vadd.f32 %v1251, %v1577
        %v1579 = vpop.f32.mrf.mxu0
        %1580 = vdwg.mxu0
        %v1581 = vsel %vm924, %v1575, -inf
        %1582 = vmax.xlane.f32.xlu0 %v1581
        %v1583 = vpop.xlane.xlu0 %1582
        %v1584 = vsel %vm924, %v1578, -inf
        %1585 = vmax.xlane.f32.xlu0 %v1584
        %v1586 = vpop.xlane.xlu0 %1585
        %v1587 = vsub.f32 %v1575, %v1583
        %v1588 = vsub.f32 %v1578, %v1586
        %v1589 = vmul.f32 %v1587, 1.442695
        %v1590 = vpow.pop %v1589
        %v1591 = vmul.f32 %v1588, 1.442695
        %v1592 = vpow.pop %v1591
        %v1593 = vsel %vm924, %v1590, 0.0
        %1594 = vadd.xlane.f32.xlu0 %v1593
        %v1595 = vpop.xlane.xlu0 %1594
        %v1596 = vsel %vm924, %v1592, 0.0
        %1597 = vadd.xlane.f32.xlu0 %v1596
        %v1598 = vpop.xlane.xlu0 %1597
        %v1599 = vrcp.pop %v1595
        %v1600 = vrcp.pop %v1598
        %v1601 = vmul.f32 %v1590, %v1599
        %v1602 = vmul.f32 %v1592, %v1600
        %v1603 = vpack.c.bf16 %v1602, %v1601
        %v1604 = vpack.c.bf16 %v1535, %v1534
        %v1606 = vsel %vm924, %v1603, 0
        %1608 = vmatprep.subr.bf16.mxu0 0
        %1609 = vmatpush1.bf16.msra.mxu0 0
        %1610 = vmatprep.subr.bf16.mxu0 0
        %1611 = vmatpush1.bf16.msra.mxu0 0
        %1612 = vmatprep.subr.bf16.mxu0 0
        %1613 = vmatpush1.bf16.msra.mxu0 0
        %1614 = vmatprep.subr.bf16.mxu0 0
        %1615 = vmatpush1.bf16.msra.mxu0 0
        %1616 = vmatprep.subr.bf16.mxu0 0
        %1617 = vmatpush1.bf16.msra.mxu0 0
        %1618 = vmatprep.subr.bf16.mxu0 0
        %1619 = vmatpush1.bf16.msra.mxu0 0
        %1620 = vmatprep.subr.bf16.mxu0 0
        %1621 = vmatpush1.bf16.msra.mxu0 0
        %1622 = vmatprep.subr.bf16.mxu0 0
        %1623 = vmatpush1.bf16.msra.mxu0 %v1604
        %1624 = vmatprep.subr.bf16.mxu0 0
        %1625 = vmatpush2.bf16.msra.mxu0 0
        %1626 = vmatprep.subr.bf16.mxu0 0
        %1627 = vmatpush2.bf16.msra.mxu0 0
        %1628 = vmatprep.subr.bf16.mxu0 0
        %1629 = vmatpush2.bf16.msra.mxu0 0
        %1630 = vmatprep.subr.bf16.mxu0 0
        %1631 = vmatpush2.bf16.msra.mxu0 0
        %1632 = vmatprep.subr.bf16.mxu0 0
        %1633 = vmatpush2.bf16.msra.mxu0 0
        %1634 = vmatprep.subr.bf16.mxu0 0
        %1635 = vmatpush2.bf16.msra.mxu0 0
        %1636 = vmatprep.subr.bf16.mxu0 0
        %1637 = vmatpush2.bf16.msra.mxu0 0
        %1638 = vmatprep.subr.bf16.mxu0 0
        %1639 = vmatpush2.bf16.msra.mxu0 0
        %1640 = vmatprep.mubr.bf16.mxu0 0
        %1641 = vmatmul.mubr.bf16.gmra.mxu0 %v1606
        %v1642 = vpop.f32.mrf.mxu0
        %v1643 = vadd.f32 0.0, %v1642
        %v1644 = vpop.f32.mrf.mxu0
        %v1645 = vpop.f32.mrf.mxu0
        %v1646 = vadd.f32 0.0, %v1645
        %v1647 = vpop.f32.mrf.mxu0
        %1648 = vdwg.mxu0
        %v1649 = vmul.f32 %v1643, %v588
        %v1650 = vmul.f32 %v1646, %v588
        %v1651 = vadd.f32 %v1649, 0.0
        %v1652 = vadd.f32 %v1650, 0.0
        %v1653 = vmul.f32 %v1394, %v593
        %v1654 = vmul.f32 %v1397, %v593
        %v1655 = vpack.c.bf16 %v1654, %v1653
        %1656 = vmatprep.subr.bf16.mxu0 0
        %1657 = vmatpush1.bf16.xpose.msra.mxu0 0
        %1658 = vmatprep.subr.bf16.mxu0 0
        %1659 = vmatpush1.bf16.xpose.msra.mxu0 0
        %1660 = vmatprep.subr.bf16.mxu0 0
        %1661 = vmatpush1.bf16.xpose.msra.mxu0 0
        %1662 = vmatprep.subr.bf16.mxu0 0
        %1663 = vmatpush1.bf16.xpose.msra.mxu0 0
        %1664 = vmatprep.subr.bf16.mxu0 0
        %1665 = vmatpush1.bf16.xpose.msra.mxu0 0
        %1666 = vmatprep.subr.bf16.mxu0 0
        %1667 = vmatpush1.bf16.xpose.msra.mxu0 0
        %1668 = vmatprep.subr.bf16.mxu0 0
        %1669 = vmatpush1.bf16.xpose.msra.mxu0 0
        %1670 = vmatprep.subr.bf16.mxu0 0
        %1671 = vmatpush1.bf16.xpose.msra.mxu0 %v1539
        %1672 = vmatprep.subr.bf16.mxu0 0
        %1673 = vmatpush2.bf16.xpose.msra.mxu0 0
        %1674 = vmatprep.subr.bf16.mxu0 0
        %1675 = vmatpush2.bf16.xpose.msra.mxu0 0
        %1676 = vmatprep.subr.bf16.mxu0 0
        %1677 = vmatpush2.bf16.xpose.msra.mxu0 0
        %1678 = vmatprep.subr.bf16.mxu0 0
        %1679 = vmatpush2.bf16.xpose.msra.mxu0 0
        %1680 = vmatprep.subr.bf16.mxu0 0
        %1681 = vmatpush2.bf16.xpose.msra.mxu0 0
        %1682 = vmatprep.subr.bf16.mxu0 0
        %1683 = vmatpush2.bf16.xpose.msra.mxu0 0
        %1684 = vmatprep.subr.bf16.mxu0 0
        %1685 = vmatpush2.bf16.xpose.msra.mxu0 0
        %1686 = vmatprep.subr.bf16.mxu0 0
        %1687 = vmatpush2.bf16.xpose.msra.mxu0 0
        %1688 = vmatprep.mubr.bf16.mxu0 0
        %1689 = vmatmul.mubr.bf16.gmra.mxu0 %v1655
        %v1690 = vpop.f32.mrf.mxu0
        %v1691 = vadd.f32 %v1250, %v1690
        %v1692 = vpop.f32.mrf.mxu0
        %v1693 = vpop.f32.mrf.mxu0
        %v1694 = vadd.f32 %v1251, %v1693
        %v1695 = vpop.f32.mrf.mxu0
        %1696 = vdwg.mxu0
        %v1697 = vsel %vm924, %v1691, -inf
        %1698 = vmax.xlane.f32.xlu0 %v1697
        %v1699 = vpop.xlane.xlu0 %1698
        %v1700 = vsel %vm924, %v1694, -inf
        %1701 = vmax.xlane.f32.xlu0 %v1700
        %v1702 = vpop.xlane.xlu0 %1701
        %v1703 = vsub.f32 %v1691, %v1699
        %v1704 = vsub.f32 %v1694, %v1702
        %v1705 = vmul.f32 %v1703, 1.442695
        %v1706 = vpow.pop %v1705
        %v1707 = vmul.f32 %v1704, 1.442695
        %v1708 = vpow.pop %v1707
        %v1709 = vsel %vm924, %v1706, 0.0
        %1710 = vadd.xlane.f32.xlu0 %v1709
        %v1711 = vpop.xlane.xlu0 %1710
        %v1712 = vsel %vm924, %v1708, 0.0
        %1713 = vadd.xlane.f32.xlu0 %v1712
        %v1714 = vpop.xlane.xlu0 %1713
        %v1715 = vrcp.pop %v1711
        %v1716 = vrcp.pop %v1714
        %v1717 = vmul.f32 %v1706, %v1715
        %v1718 = vmul.f32 %v1708, %v1716
        %v1719 = vpack.c.bf16 %v1718, %v1717
        %v1721 = vsel %vm924, %v1719, 0
        %1723 = vmatprep.subr.bf16.mxu0 0
        %1724 = vmatpush1.bf16.msra.mxu0 0
        %1725 = vmatprep.subr.bf16.mxu0 0
        %1726 = vmatpush1.bf16.msra.mxu0 0
        %1727 = vmatprep.subr.bf16.mxu0 0
        %1728 = vmatpush1.bf16.msra.mxu0 0
        %1729 = vmatprep.subr.bf16.mxu0 0
        %1730 = vmatpush1.bf16.msra.mxu0 0
        %1731 = vmatprep.subr.bf16.mxu0 0
        %1732 = vmatpush1.bf16.msra.mxu0 0
        %1733 = vmatprep.subr.bf16.mxu0 0
        %1734 = vmatpush1.bf16.msra.mxu0 0
        %1735 = vmatprep.subr.bf16.mxu0 0
        %1736 = vmatpush1.bf16.msra.mxu0 0
        %1737 = vmatprep.subr.bf16.mxu0 0
        %1738 = vmatpush1.bf16.msra.mxu0 %v1604
        %1739 = vmatprep.subr.bf16.mxu0 0
        %1740 = vmatpush2.bf16.msra.mxu0 0
        %1741 = vmatprep.subr.bf16.mxu0 0
        %1742 = vmatpush2.bf16.msra.mxu0 0
        %1743 = vmatprep.subr.bf16.mxu0 0
        %1744 = vmatpush2.bf16.msra.mxu0 0
        %1745 = vmatprep.subr.bf16.mxu0 0
        %1746 = vmatpush2.bf16.msra.mxu0 0
        %1747 = vmatprep.subr.bf16.mxu0 0
        %1748 = vmatpush2.bf16.msra.mxu0 0
        %1749 = vmatprep.subr.bf16.mxu0 0
        %1750 = vmatpush2.bf16.msra.mxu0 0
        %1751 = vmatprep.subr.bf16.mxu0 0
        %1752 = vmatpush2.bf16.msra.mxu0 0
        %1753 = vmatprep.subr.bf16.mxu0 0
        %1754 = vmatpush2.bf16.msra.mxu0 0
        %1755 = vmatprep.mubr.bf16.mxu0 0
        %1756 = vmatmul.mubr.bf16.gmra.mxu0 %v1721
        %v1757 = vpop.f32.mrf.mxu0
        %v1758 = vadd.f32 0.0, %v1757
        %v1759 = vpop.f32.mrf.mxu0
        %v1760 = vpop.f32.mrf.mxu0
        %v1761 = vadd.f32 0.0, %v1760
        %v1762 = vpop.f32.mrf.mxu0
        %1763 = vdwg.mxu0
        %v1764 = vmul.f32 %v1758, %v593
        %v1765 = vmul.f32 %v1761, %v593
        %v1766 = vadd.f32 %v1651, %v1764
        %v1767 = vadd.f32 %v1652, %v1765
        %v1768 = vpack.c.bf16 %v1767, %v1766
        %v1769 = vlaneseq
        %v1770 = vshrl.u32 %v1769, 7
        %v1771 = vsub.s32 0, %v1770
        %v1772 = vrot.slane %v1305, %v1771
        %v1789 = vunpack.c.l.b16 %v1286
        %v1790 = vunpack.c.l.b16 %v1287
        %v1791 = vunpack.c.l.b16 %v1288
        %v1792 = vunpack.c.l.b16 %v1289
        %v1793 = vunpack.c.l.b16 %v1290
        %v1794 = vunpack.c.l.b16 %v1291
        %v1795 = vunpack.c.l.b16 %v1292
        %v1796 = vunpack.c.l.b16 %v1293
        %v1797 = vunpack.c.l.b16 %v1294
        %v1798 = vunpack.c.l.b16 %v1295
        %v1799 = vunpack.c.l.b16 %v1296
        %v1800 = vunpack.c.l.b16 %v1297
        %v1801 = vunpack.c.l.b16 %v1298
        %v1802 = vunpack.c.l.b16 %v1299
        %v1803 = vunpack.c.l.b16 %v1300
        %v1804 = vunpack.c.l.b16 %v1301
        %v1805 = vpack.c.b16 %v1790, %v1789
        %v1806 = vpack.c.b16 %v1792, %v1791
        %v1807 = vpack.c.b16 %v1794, %v1793
        %v1808 = vpack.c.b16 %v1796, %v1795
        %v1809 = vpack.c.b16 %v1798, %v1797
        %v1810 = vpack.c.b16 %v1800, %v1799
        %v1811 = vpack.c.b16 %v1802, %v1801
        %v1812 = vpack.c.b16 %v1804, %v1803
        %1821 = vmatprep.subr.bf16.mxu0 0
        %1822 = vmatpush1.bf16.msra.mxu0 %v1812
        %1823 = vmatprep.subr.bf16.mxu0 0
        %1824 = vmatpush1.bf16.msra.mxu0 %v1811
        %1825 = vmatprep.subr.bf16.mxu0 0
        %1826 = vmatpush1.bf16.msra.mxu0 %v1810
        %1827 = vmatprep.subr.bf16.mxu0 0
        %1828 = vmatpush1.bf16.msra.mxu0 %v1809
        %1829 = vmatprep.subr.bf16.mxu0 0
        %1830 = vmatpush1.bf16.msra.mxu0 %v1808
        %1831 = vmatprep.subr.bf16.mxu0 0
        %1832 = vmatpush1.bf16.msra.mxu0 %v1807
        %1833 = vmatprep.subr.bf16.mxu0 0
        %1834 = vmatpush1.bf16.msra.mxu0 %v1806
        %1835 = vmatprep.subr.bf16.mxu0 0
        %1836 = vmatpush1.bf16.msra.mxu0 %v1805
        %1837 = vmatprep.subr.bf16.mxu0 0
        %1838 = vmatpush2.bf16.msra.mxu0 0
        %1839 = vmatprep.subr.bf16.mxu0 0
        %1840 = vmatpush2.bf16.msra.mxu0 0
        %1841 = vmatprep.subr.bf16.mxu0 0
        %1842 = vmatpush2.bf16.msra.mxu0 0
        %1843 = vmatprep.subr.bf16.mxu0 0
        %1844 = vmatpush2.bf16.msra.mxu0 0
        %1845 = vmatprep.subr.bf16.mxu0 0
        %1846 = vmatpush2.bf16.msra.mxu0 0
        %1847 = vmatprep.subr.bf16.mxu0 0
        %1848 = vmatpush2.bf16.msra.mxu0 0
        %1849 = vmatprep.subr.bf16.mxu0 0
        %1850 = vmatpush2.bf16.msra.mxu0 0
        %1851 = vmatprep.subr.bf16.mxu0 0
        %1852 = vmatpush2.bf16.msra.mxu0 0
        %1853 = vmatprep.mubr.bf16.mxu0 0
        %1854 = vmatmul.mubr.bf16.gmra.mxu0 %v1768
        %v1855 = vpop.f32.mrf.mxu0
        %v1856 = vadd.f32 %v1772, %v1855
        %v1857 = vpop.f32.mrf.mxu0
        %v1858 = vpop.f32.mrf.mxu0
        %v1859 = vadd.f32 %v1772, %v1858
        %v1860 = vpop.f32.mrf.mxu0
        %1861 = vdwg.mxu0
        %v1862 = vadd.f32 %v1246, %v1856
        %v1863 = vadd.f32 %v1247, %v1859
        %v1864 = vld [vmem:[%s498 + $0xa] sm:$0x1]
        %v1865 = vld [vmem:[%s498 + $0xb] sm:$0x1]
        %1866 = vadd.xlane.f32.xlu0 %v1862
        %v1867 = vpop.xlane.xlu0 %1866
        %1868 = vadd.xlane.f32.xlu0 %v1863
        %v1869 = vpop.xlane.xlu0 %1868
        %v1870 = vmul.f32 %v1867, 0.03125
        %v1871 = vmul.f32 %v1869, 0.03125
        %v1872 = vmul.f32 %v1862, %v1862
        %v1873 = vmul.f32 %v1863, %v1863
        %1874 = vadd.xlane.f32.xlu0 %v1872
        %v1875 = vpop.xlane.xlu0 %1874
        %1876 = vadd.xlane.f32.xlu0 %v1873
        %v1877 = vpop.xlane.xlu0 %1876
        %v1878 = vmul.f32 %v1875, 0.03125
        %v1879 = vmul.f32 %v1877, 0.03125
        %v1880 = vmul.f32 %v1870, %v1870
        %v1881 = vmul.f32 %v1871, %v1871
        %v1882 = vsub.f32 %v1878, %v1880
        %v1883 = vsub.f32 %v1879, %v1881
        %v1884 = vsub.f32 %v1862, %v1870
        %v1885 = vsub.f32 %v1863, %v1871
        %v1886 = vadd.f32 %v1882, 1e-05
        %v1887 = vadd.f32 %v1883, 1e-05
        %v1888 = vrsqrt.pop %v1886
        %v1889 = vrsqrt.pop %v1887
        %v1890 = vmul.f32 %v1884, %v1888
        %v1891 = vmul.f32 %v1885, %v1889
        %v1892 = vlaneseq
        %v1893 = vshrl.u32 %v1892, 7
        %v1894 = vsub.s32 0, %v1893
        %v1895 = vrot.slane %v1864, %v1894
        %v1896 = vmul.f32 %v1890, %v1895
        %v1897 = vmul.f32 %v1891, %v1895
        %v1898 = vlaneseq
        %v1899 = vshrl.u32 %v1898, 7
        %v1900 = vsub.s32 0, %v1899
        %v1901 = vrot.slane %v1865, %v1900
        %v1902 = vadd.f32 %v1896, %v1901
        %v1903 = vadd.f32 %v1897, %v1901
        %v1904 = vpack.c.bf16 %v1903, %v1902
        %v1905 = vld [vmem:[%s480] sm:$0xf]
        %v1906 = vld [vmem:[%s480 + $0x4] sm:$0xf]
        %v1907 = vld [vmem:[%s480 + $0x8] sm:$0xf]
        %v1908 = vld [vmem:[%s480 + $0xc] sm:$0xf]
        %v1909 = vld [vmem:[%s480 + $0x10] sm:$0xf]
        %v1910 = vld [vmem:[%s480 + $0x14] sm:$0xf]
        %v1911 = vld [vmem:[%s480 + $0x18] sm:$0xf]
        %v1912 = vld [vmem:[%s480 + $0x1c] sm:$0xf]
        %v1913 = vld [vmem:[%s480 + $0x20] sm:$0xf]
        %v1914 = vld [vmem:[%s480 + $0x24] sm:$0xf]
        %v1915 = vld [vmem:[%s480 + $0x28] sm:$0xf]
        %v1916 = vld [vmem:[%s480 + $0x2c] sm:$0xf]
        %v1917 = vld [vmem:[%s480 + $0x30] sm:$0xf]
        %v1918 = vld [vmem:[%s480 + $0x34] sm:$0xf]
        %v1919 = vld [vmem:[%s480 + $0x38] sm:$0xf]
        %v1920 = vld [vmem:[%s480 + $0x3c] sm:$0xf]
        %v1921 = vld [vmem:[%s498 + $0xe] sm:$0x1]
        %v1922 = vlaneseq
        %v1923 = vshrl.u32 %v1922, 7
        %v1924 = vsub.s32 0, %v1923
        %v1925 = vrot.slane %v1921, %v1924
        %v1942 = vunpack.c.l.b16 %v1905
        %v1943 = vunpack.c.l.b16 %v1906
        %v1944 = vunpack.c.l.b16 %v1907
        %v1945 = vunpack.c.l.b16 %v1908
        %v1946 = vunpack.c.l.b16 %v1909
        %v1947 = vunpack.c.l.b16 %v1910
        %v1948 = vunpack.c.l.b16 %v1911
        %v1949 = vunpack.c.l.b16 %v1912
        %v1950 = vunpack.c.l.b16 %v1913
        %v1951 = vunpack.c.l.b16 %v1914
        %v1952 = vunpack.c.l.b16 %v1915
        %v1953 = vunpack.c.l.b16 %v1916
        %v1954 = vunpack.c.l.b16 %v1917
        %v1955 = vunpack.c.l.b16 %v1918
        %v1956 = vunpack.c.l.b16 %v1919
        %v1957 = vunpack.c.l.b16 %v1920
        %v1958 = vpack.c.b16 %v1943, %v1942
        %v1959 = vpack.c.b16 %v1945, %v1944
        %v1960 = vpack.c.b16 %v1947, %v1946
        %v1961 = vpack.c.b16 %v1949, %v1948
        %v1962 = vpack.c.b16 %v1951, %v1950
        %v1963 = vpack.c.b16 %v1953, %v1952
        %v1964 = vpack.c.b16 %v1955, %v1954
        %v1965 = vpack.c.b16 %v1957, %v1956
        %1974 = vmatprep.subr.bf16.mxu0 0
        %1975 = vmatpush1.bf16.msra.mxu0 %v1965
        %1976 = vmatprep.subr.bf16.mxu0 0
        %1977 = vmatpush1.bf16.msra.mxu0 %v1964
        %1978 = vmatprep.subr.bf16.mxu0 0
        %1979 = vmatpush1.bf16.msra.mxu0 %v1963
        %1980 = vmatprep.subr.bf16.mxu0 0
        %1981 = vmatpush1.bf16.msra.mxu0 %v1962
        %1982 = vmatprep.subr.bf16.mxu0 0
        %1983 = vmatpush1.bf16.msra.mxu0 %v1961
        %1984 = vmatprep.subr.bf16.mxu0 0
        %1985 = vmatpush1.bf16.msra.mxu0 %v1960
        %1986 = vmatprep.subr.bf16.mxu0 0
        %1987 = vmatpush1.bf16.msra.mxu0 %v1959
        %1988 = vmatprep.subr.bf16.mxu0 0
        %1989 = vmatpush1.bf16.msra.mxu0 %v1958
        %1990 = vmatprep.subr.bf16.mxu0 0
        %1991 = vmatpush2.bf16.msra.mxu0 0
        %1992 = vmatprep.subr.bf16.mxu0 0
        %1993 = vmatpush2.bf16.msra.mxu0 0
        %1994 = vmatprep.subr.bf16.mxu0 0
        %1995 = vmatpush2.bf16.msra.mxu0 0
        %1996 = vmatprep.subr.bf16.mxu0 0
        %1997 = vmatpush2.bf16.msra.mxu0 0
        %1998 = vmatprep.subr.bf16.mxu0 0
        %1999 = vmatpush2.bf16.msra.mxu0 0
        %2000 = vmatprep.subr.bf16.mxu0 0
        %2001 = vmatpush2.bf16.msra.mxu0 0
        %2002 = vmatprep.subr.bf16.mxu0 0
        %2003 = vmatpush2.bf16.msra.mxu0 0
        %2004 = vmatprep.subr.bf16.mxu0 0
        %2005 = vmatpush2.bf16.msra.mxu0 0
        %2006 = vmatprep.mubr.bf16.mxu0 0
        %2007 = vmatmul.mubr.bf16.gmra.mxu0 %v1904
        %v2008 = vpop.f32.mrf.mxu0
        %v2009 = vadd.f32 %v1925, %v2008
        %v2010 = vpop.f32.mrf.mxu0
        %v2011 = vpop.f32.mrf.mxu0
        %v2012 = vadd.f32 %v1925, %v2011
        %v2013 = vpop.f32.mrf.mxu0
        %2014 = vdwg.mxu0
        %v2015 = vmax.f32 %v2009, 0.0
        %v2016 = vmax.f32 %v2012, 0.0
        %v2017 = vpack.c.bf16 %v2016, %v2015
        %v2018 = vld [vmem:[%s489] sm:$0xf]
        %v2019 = vld [vmem:[%s489 + $0x4] sm:$0xf]
        %v2020 = vld [vmem:[%s489 + $0x8] sm:$0xf]
        %v2021 = vld [vmem:[%s489 + $0xc] sm:$0xf]
        %v2022 = vld [vmem:[%s489 + $0x10] sm:$0xf]
        %v2023 = vld [vmem:[%s489 + $0x14] sm:$0xf]
        %v2024 = vld [vmem:[%s489 + $0x18] sm:$0xf]
        %v2025 = vld [vmem:[%s489 + $0x1c] sm:$0xf]
        %v2026 = vld [vmem:[%s489 + $0x20] sm:$0xf]
        %v2027 = vld [vmem:[%s489 + $0x24] sm:$0xf]
        %v2028 = vld [vmem:[%s489 + $0x28] sm:$0xf]
        %v2029 = vld [vmem:[%s489 + $0x2c] sm:$0xf]
        %v2030 = vld [vmem:[%s489 + $0x30] sm:$0xf]
        %v2031 = vld [vmem:[%s489 + $0x34] sm:$0xf]
        %v2032 = vld [vmem:[%s489 + $0x38] sm:$0xf]
        %v2033 = vld [vmem:[%s489 + $0x3c] sm:$0xf]
        %v2034 = vld [vmem:[%s498 + $0xf] sm:$0x1]
        %v2035 = vlaneseq
        %v2036 = vshrl.u32 %v2035, 7
        %v2037 = vsub.s32 0, %v2036
        %v2038 = vrot.slane %v2034, %v2037
        %v2055 = vunpack.c.l.b16 %v2018
        %v2056 = vunpack.c.l.b16 %v2019
        %v2057 = vunpack.c.l.b16 %v2020
        %v2058 = vunpack.c.l.b16 %v2021
        %v2059 = vunpack.c.l.b16 %v2022
        %v2060 = vunpack.c.l.b16 %v2023
        %v2061 = vunpack.c.l.b16 %v2024
        %v2062 = vunpack.c.l.b16 %v2025
        %v2063 = vunpack.c.l.b16 %v2026
        %v2064 = vunpack.c.l.b16 %v2027
        %v2065 = vunpack.c.l.b16 %v2028
        %v2066 = vunpack.c.l.b16 %v2029
        %v2067 = vunpack.c.l.b16 %v2030
        %v2068 = vunpack.c.l.b16 %v2031
        %v2069 = vunpack.c.l.b16 %v2032
        %v2070 = vunpack.c.l.b16 %v2033
        %v2071 = vpack.c.b16 %v2056, %v2055
        %v2072 = vpack.c.b16 %v2058, %v2057
        %v2073 = vpack.c.b16 %v2060, %v2059
        %v2074 = vpack.c.b16 %v2062, %v2061
        %v2075 = vpack.c.b16 %v2064, %v2063
        %v2076 = vpack.c.b16 %v2066, %v2065
        %v2077 = vpack.c.b16 %v2068, %v2067
        %v2078 = vpack.c.b16 %v2070, %v2069
        %2087 = vmatprep.subr.bf16.mxu0 0
        %2088 = vmatpush1.bf16.msra.mxu0 %v2078
        %2089 = vmatprep.subr.bf16.mxu0 0
        %2090 = vmatpush1.bf16.msra.mxu0 %v2077
        %2091 = vmatprep.subr.bf16.mxu0 0
        %2092 = vmatpush1.bf16.msra.mxu0 %v2076
        %2093 = vmatprep.subr.bf16.mxu0 0
        %2094 = vmatpush1.bf16.msra.mxu0 %v2075
        %2095 = vmatprep.subr.bf16.mxu0 0
        %2096 = vmatpush1.bf16.msra.mxu0 %v2074
        %2097 = vmatprep.subr.bf16.mxu0 0
        %2098 = vmatpush1.bf16.msra.mxu0 %v2073
        %2099 = vmatprep.subr.bf16.mxu0 0
        %2100 = vmatpush1.bf16.msra.mxu0 %v2072
        %2101 = vmatprep.subr.bf16.mxu0 0
        %2102 = vmatpush1.bf16.msra.mxu0 %v2071
        %2103 = vmatprep.subr.bf16.mxu0 0
        %2104 = vmatpush2.bf16.msra.mxu0 0
        %2105 = vmatprep.subr.bf16.mxu0 0
        %2106 = vmatpush2.bf16.msra.mxu0 0
        %2107 = vmatprep.subr.bf16.mxu0 0
        %2108 = vmatpush2.bf16.msra.mxu0 0
        %2109 = vmatprep.subr.bf16.mxu0 0
        %2110 = vmatpush2.bf16.msra.mxu0 0
        %2111 = vmatprep.subr.bf16.mxu0 0
        %2112 = vmatpush2.bf16.msra.mxu0 0
        %2113 = vmatprep.subr.bf16.mxu0 0
        %2114 = vmatpush2.bf16.msra.mxu0 0
        %2115 = vmatprep.subr.bf16.mxu0 0
        %2116 = vmatpush2.bf16.msra.mxu0 0
        %2117 = vmatprep.subr.bf16.mxu0 0
        %2118 = vmatpush2.bf16.msra.mxu0 0
        %2119 = vmatprep.mubr.bf16.mxu0 0
        %2120 = vmatmul.mubr.bf16.gmra.mxu0 %v2017
        %v2121 = vpop.f32.mrf.mxu0
        %v2122 = vadd.f32 %v2038, %v2121
        %v2123 = vpop.f32.mrf.mxu0
        %v2124 = vpop.f32.mrf.mxu0
        %v2125 = vadd.f32 %v2038, %v2124
        %v2126 = vpop.f32.mrf.mxu0
        %2127 = vdwg.mxu0
        %v2128 = vadd.f32 %v1902, %v2122
        %v2129 = vadd.f32 %v1903, %v2125
        %v2130 = vld [vmem:[%s498 + $0xc] sm:$0x1]
        %v2131 = vld [vmem:[%s498 + $0xd] sm:$0x1]
        %2132 = vadd.xlane.f32.xlu0 %v2128
        %v2133 = vpop.xlane.xlu0 %2132
        %2134 = vadd.xlane.f32.xlu0 %v2129
        %v2135 = vpop.xlane.xlu0 %2134
        %v2136 = vmul.f32 %v2133, 0.03125
        %v2137 = vmul.f32 %v2135, 0.03125
        %v2138 = vmul.f32 %v2128, %v2128
        %v2139 = vmul.f32 %v2129, %v2129
        %2140 = vadd.xlane.f32.xlu0 %v2138
        %v2141 = vpop.xlane.xlu0 %2140
        %2142 = vadd.xlane.f32.xlu0 %v2139
        %v2143 = vpop.xlane.xlu0 %2142
        %v2144 = vmul.f32 %v2141, 0.03125
        %v2145 = vmul.f32 %v2143, 0.03125
        %v2146 = vmul.f32 %v2136, %v2136
        %v2147 = vmul.f32 %v2137, %v2137
        %v2148 = vsub.f32 %v2144, %v2146
        %v2149 = vsub.f32 %v2145, %v2147
        %v2150 = vsub.f32 %v2128, %v2136
        %v2151 = vsub.f32 %v2129, %v2137
        %v2152 = vadd.f32 %v2148, 1e-05
        %v2153 = vadd.f32 %v2149, 1e-05
        %v2154 = vrsqrt.pop %v2152
        %v2155 = vrsqrt.pop %v2153
        %v2156 = vmul.f32 %v2150, %v2154
        %v2157 = vmul.f32 %v2151, %v2155
        %v2158 = vlaneseq
        %v2159 = vshrl.u32 %v2158, 7
        %v2160 = vsub.s32 0, %v2159
        %v2161 = vrot.slane %v2130, %v2160
        %v2162 = vmul.f32 %v2156, %v2161
        %v2163 = vmul.f32 %v2157, %v2161
        %v2164 = vlaneseq
        %v2165 = vshrl.u32 %v2164, 7
        %v2166 = vsub.s32 0, %v2165
        %v2167 = vrot.slane %v2131, %v2166
        %v2168 = vadd.f32 %v2162, %v2167
        %v2169 = vadd.f32 %v2163, %v2167
        %2170 = vst [vmem:[#allocation2] sm:$0xff] %v2168
        %2171 = vst [vmem:[#allocation2 + $0x8] sm:$0xff] %v2169
        %p2172 = scmp.eq.s32.totalorder %s33, 1
        // Predicated region
        $region85: #{_forward_impl.1} parent=63 // pred_check
          %p2173 = pneg %p2172
        $region86: #{_forward_impl.1} parent=63 // pred_check_branch
          %2175 = sbr.rel (%p2173) target = $region88
        $region87: #{_forward_impl.1} parent=63 // pred_region
          %v2176 = vpack.c.bf16 %v2169, %v2168
          %v2177 = vld [vmem:[%s9] sm:$0xf]
          %v2178 = vld [vmem:[%s9 + $0x4] sm:$0xf]
          %v2179 = vld [vmem:[%s9 + $0x8] sm:$0xf]
          %v2180 = vld [vmem:[%s9 + $0xc] sm:$0xf]
          %v2181 = vld [vmem:[%s9 + $0x10] sm:$0xf]
          %v2182 = vld [vmem:[%s9 + $0x14] sm:$0xf]
          %v2183 = vld [vmem:[%s9 + $0x18] sm:$0xf]
          %v2184 = vld [vmem:[%s9 + $0x1c] sm:$0xf]
          %v2185 = vld [vmem:[%s9 + $0x20] sm:$0xf]
          %v2186 = vld [vmem:[%s9 + $0x24] sm:$0xf]
          %v2187 = vld [vmem:[%s9 + $0x28] sm:$0xf]
          %v2188 = vld [vmem:[%s9 + $0x2c] sm:$0xf]
          %v2189 = vld [vmem:[%s9 + $0x30] sm:$0xf]
          %v2190 = vld [vmem:[%s9 + $0x34] sm:$0xf]
          %v2191 = vld [vmem:[%s9 + $0x38] sm:$0xf]
          %v2192 = vld [vmem:[%s9 + $0x3c] sm:$0xf]
          %v2193 = vld [vmem:[%s10] sm:$0x1]
          %v2195 = vlaneseq
          %v2196 = vshrl.u32 %v2195, 7
          %v2197 = vsub.s32 0, %v2196
          %v2198 = vrot.slane %v2193, %v2197
          %v2216 = vunpack.c.l.b16 %v2177
          %v2217 = vunpack.c.l.b16 %v2178
          %v2218 = vunpack.c.l.b16 %v2179
          %v2219 = vunpack.c.l.b16 %v2180
          %v2220 = vunpack.c.l.b16 %v2181
          %v2221 = vunpack.c.l.b16 %v2182
          %v2222 = vunpack.c.l.b16 %v2183
          %v2223 = vunpack.c.l.b16 %v2184
          %v2224 = vunpack.c.l.b16 %v2185
          %v2225 = vunpack.c.l.b16 %v2186
          %v2226 = vunpack.c.l.b16 %v2187
          %v2227 = vunpack.c.l.b16 %v2188
          %v2228 = vunpack.c.l.b16 %v2189
          %v2229 = vunpack.c.l.b16 %v2190
          %v2230 = vunpack.c.l.b16 %v2191
          %v2231 = vunpack.c.l.b16 %v2192
          %v2232 = vpack.c.b16 %v2217, %v2216
          %v2233 = vpack.c.b16 %v2219, %v2218
          %v2234 = vpack.c.b16 %v2221, %v2220
          %v2235 = vpack.c.b16 %v2223, %v2222
          %v2236 = vpack.c.b16 %v2225, %v2224
          %v2237 = vpack.c.b16 %v2227, %v2226
          %v2238 = vpack.c.b16 %v2229, %v2228
          %v2239 = vpack.c.b16 %v2231, %v2230
          %2248 = vmatprep.subr.bf16.mxu0 0
          %2249 = vmatpush1.bf16.msra.mxu0 %v2239
          %2250 = vmatprep.subr.bf16.mxu0 0
          %2251 = vmatpush1.bf16.msra.mxu0 %v2238
          %2252 = vmatprep.subr.bf16.mxu0 0
          %2253 = vmatpush1.bf16.msra.mxu0 %v2237
          %2254 = vmatprep.subr.bf16.mxu0 0
          %2255 = vmatpush1.bf16.msra.mxu0 %v2236
          %2256 = vmatprep.subr.bf16.mxu0 0
          %2257 = vmatpush1.bf16.msra.mxu0 %v2235
          %2258 = vmatprep.subr.bf16.mxu0 0
          %2259 = vmatpush1.bf16.msra.mxu0 %v2234
          %2260 = vmatprep.subr.bf16.mxu0 0
          %2261 = vmatpush1.bf16.msra.mxu0 %v2233
          %2262 = vmatprep.subr.bf16.mxu0 0
          %2263 = vmatpush1.bf16.msra.mxu0 %v2232
          %2264 = vmatprep.subr.bf16.mxu0 0
          %2265 = vmatpush2.bf16.msra.mxu0 0
          %2266 = vmatprep.subr.bf16.mxu0 0
          %2267 = vmatpush2.bf16.msra.mxu0 0
          %2268 = vmatprep.subr.bf16.mxu0 0
          %2269 = vmatpush2.bf16.msra.mxu0 0
          %2270 = vmatprep.subr.bf16.mxu0 0
          %2271 = vmatpush2.bf16.msra.mxu0 0
          %2272 = vmatprep.subr.bf16.mxu0 0
          %2273 = vmatpush2.bf16.msra.mxu0 0
          %2274 = vmatprep.subr.bf16.mxu0 0
          %2275 = vmatpush2.bf16.msra.mxu0 0
          %2276 = vmatprep.subr.bf16.mxu0 0
          %2277 = vmatpush2.bf16.msra.mxu0 0
          %2278 = vmatprep.subr.bf16.mxu0 0
          %2279 = vmatpush2.bf16.msra.mxu0 0
          %2280 = vmatprep.mubr.bf16.mxu0 0
          %2281 = vmatmul.mubr.bf16.gmra.mxu0 %v2176
          %v2282 = vpop.f32.mrf.mxu0
          %v2283 = vadd.f32 %v2198, %v2282
          %v2284 = vpop.f32.mrf.mxu0
          %v2285 = vpop.f32.mrf.mxu0
          %v2286 = vadd.f32 %v2198, %v2285
          %v2287 = vpop.f32.mrf.mxu0
          %2288 = vdwg.mxu0
          %2289 = vst [vmem:[%s12] sm:$0xff] %v2283
          %2290 = vst [vmem:[%s12 + $0x8] sm:$0xff] %v2286
        $region88: #{_forward_impl.1} parent=63 // pred_fallthru
          _
        %p2291 = scmp.lt.s32.totalorder %s33, 1
        %s2292 = scalar_select %p2291, %s33, 1
        %s2293 = smul.addr %s2292, 2
        %s2294 = smul.addr %s2293, 8
        %s2295 = scalar_lea.vmem %s11, %s2294
        // Predicated region
        $region89: #{_forward_impl.1} parent=63 // pred_check
          %p2296 = pneg %p307
        $region90: #{_forward_impl.1} parent=63 // pred_check_branch
          %2298 = sbr.rel (%p2296) target = $region92
        $region91: #{_forward_impl.1} parent=63 // pred_region
          _
        $region92: #{_forward_impl.1} parent=63 // pred_fallthru
          _
        // Predicated region
        $region93: #{_forward_impl.1} parent=63 // pred_check
          %p2299 = pneg %p328
        $region94: #{_forward_impl.1} parent=63 // pred_check_branch
          %2301 = sbr.rel (%p2299) target = $region96
        $region95: #{_forward_impl.1} parent=63 // pred_region
          _
        $region96: #{_forward_impl.1} parent=63 // pred_fallthru
          _
        // Predicated region
        $region97: #{_forward_impl.1} parent=63 // pred_check
          %p2302 = pneg %p328
        $region98: #{_forward_impl.1} parent=63 // pred_check_branch
          %2304 = sbr.rel (%p2302) target = $region100
        $region99: #{_forward_impl.1} parent=63 // pred_region
          _
        $region100: #{_forward_impl.1} parent=63 // pred_fallthru
          _
      $region64: #{_forward_impl.1} parent=5 // pred_fallthru
        _
      %p2305 = scmp.le.s32.totalorder 2, %s28
      // Predicated region
      $region101: #{_forward_impl.1} parent=5 // pred_check
        %p2306 = pneg %p2305
      $region102: #{_forward_impl.1} parent=5 // pred_check_branch
        %2308 = sbr.rel (%p2306) target = $region104
      $region103: #{_forward_impl.1} parent=5 // pred_region
        %s2309 = ssub.s32 %s28, 2
        // Predicated region
        $region105: #{_forward_impl.1} parent=103 // pred_check
          %p2310 = pneg %p313
        $region106: #{_forward_impl.1} parent=103 // pred_check_branch
          %2312 = sbr.rel (%p2310) target = $region108
        $region107: #{_forward_impl.1} parent=103 // pred_region
          %p2313 = scmp.lt.s32.totalorder %s34, 1
          %s2314 = scalar_select %p2313, %s34, 1
          %s2315 = smul.addr %s2314, 2
          %s2316 = smul.addr %s2315, 8
          %s2317 = scalar_lea.vmem %s11, %s2316
        $region108: #{_forward_impl.1} parent=103 // pred_fallthru
          _
      $region104: #{_forward_impl.1} parent=5 // pred_fallthru
        _
    $region6: #{_forward_impl.1} parent=1 // loop_footer
      %s32 = sadd.s32 1, %s28
    $region7: #{_forward_impl.1} parent=1 // loop_footer_branch
      %27 = sbr.rel target = $region3
    $region8: #{_forward_impl.1} parent=1 // loop_exit
      _
    %2318 = vsyncpa [#allocation4], 1
    %s2319 = scalar_lea.sflag [#allocation4], 1
    %2320 = vsyncpa %s2319, 1
    %2321 = vsyncpa [#allocation6], 1
    %s2322 = scalar_lea.sflag [#allocation6], 1
    %2323 = vsyncpa %s2322, 1
    %2324 = vsyncpa [#allocation9], 1
    %s2325 = scalar_lea.sflag [#allocation9], 1
    %2326 = vsyncpa %s2325, 1

</llo_original>
